<compile_context>
chip_gen: v6e
topology: v6e:2x2x1
jax: 0.10.0
libtpu: 0.0.40
codegen_flags: <defaults>
</compile_context>

<pallas_src>
import jax
import jax.numpy as jnp
import numpy as np
from jax.experimental import pallas as pl
from jax.experimental.pallas import tpu as pltpu

HIGH = jax.lax.Precision.HIGHEST  # only used by the pure-JAX reference


# ----------------------------------------------------------------------------
# Kernel
# ----------------------------------------------------------------------------
def sftca_kernel(x_ref, pool_ref, w1_ref, fh_rep_ref, sc0_ref, sc1_rep_ref,
                 bd1_ref, bdfw_ref, bdsh0_ref, bdsh1_ref, o_ref):
    # x_ref: (TB, H, W*C) lane-dense block (NHWC with W and C merged).
    xb = x_ref[...]                                   # (TB, H, WC) float32
    TB, H, WC = xb.shape
    R = TB * H
    x2 = xb.reshape(R, WC)                            # leading-dim merge only
    f32 = jnp.float32

    # ---- adaptive average pools ------------------------------------------
    # mean over W via pooling matrix on the MXU (keeps lanes dense, XLU idle)
    x_h = jnp.dot(x2, pool_ref[...], preferred_element_type=f32)     # (R, C)
    # mean over H: sublane reduction, stays lane-dense
    x_w = jnp.mean(xb, axis=1)                                       # (TB, WC)
    # global average pool = mean over W of x_w
    gap = jnp.dot(x_w, pool_ref[...], preferred_element_type=f32)    # (TB, C)

    # ---- coordinate-attention branch ---------------------------------------
    # height path: conv_1x1 + relu, then F_h with W-replicated columns so the
    # sigmoid result is already broadcast over W and lane-dense.
    y_h = jnp.maximum(
        jnp.dot(x_h, w1_ref[...], preferred_element_type=f32), 0.0)  # (R, Cr)
    s_h = jax.nn.sigmoid(
        jnp.dot(y_h, fh_rep_ref[...], preferred_element_type=f32))   # (R, WC)
    # width path: block-diagonal conv_1x1 / F_w keep the (w, c) lanes dense.
    y_w = jnp.maximum(
        jnp.dot(x_w, bd1_ref[...], preferred_element_type=f32), 0.0)  # (TB, W*Cr)
    s_w = jax.nn.sigmoid(
        jnp.dot(y_w, bdfw_ref[...], preferred_element_type=f32))      # (TB, WC)

    # ---- SFT scale branch (global) -----------------------------------------
    t = jnp.dot(gap, sc0_ref[...], preferred_element_type=f32)        # (TB, Cr)
    t = jnp.where(t >= 0, t, 0.1 * t)                                  # leaky_relu(0.1)
    scale = jax.nn.sigmoid(
        jnp.dot(t, sc1_rep_ref[...], preferred_element_type=f32))     # (TB, WC)

    # ---- SFT shift branch (per-pixel hot path, block-diagonal 1x1 convs) ----
    u = jnp.dot(x2, bdsh0_ref[...], preferred_element_type=f32)       # (R, W*Cr)
    u = jnp.where(u >= 0, u, 0.1 * u)                                  # leaky_relu(0.1)
    shift = jnp.dot(u, bdsh1_ref[...], preferred_element_type=f32)    # (R, WC)

    # ---- combine: x * s_h * s_w * ((x + shift) * scale) ---------------------
    row_part = x2 * s_h * (x2 + shift)                # per-(b, h, w, c) factors
    batch_part = s_w * scale                          # per-(b, w, c) factors
    out = row_part.reshape(TB, H, WC) * batch_part[:, None, :]
    o_ref[...] = out.astype(o_ref.dtype)


# ----------------------------------------------------------------------------
# Wrapper
# ----------------------------------------------------------------------------
def _pick_tb(batch, per_image_bytes, target_block_bytes):
    """Images per grid step: ~target-sized blocks, even batch split, and keep
    >= 2 grid steps when possible so both v7x TensorCores get work."""
    tb = max(1, min(batch, target_block_bytes // max(per_image_bytes, 1)))
    while tb > 1 and (batch % tb != 0 or batch // tb < 2):
        tb -= 1
    return int(tb)


def _prep_params(weights, W):
    """Transpose PyTorch (Cout, Cin) 1x1-conv weights to (Cin, Cout) and build
    the lane-dense helper matrices (pooling matrix, block-diagonal and
    column-replicated weights).  All built once, outside the kernel."""
    W1x1, WFh, WFw, Wsc0, Wsc1, Wsh0, Wsh1 = weights
    C = W1x1.shape[1]
    eye_w = jnp.eye(W, dtype=jnp.float32)
    pool = jnp.tile(jnp.eye(C, dtype=jnp.float32), (W, 1)) / float(W)  # (W*C, C)
    w1 = W1x1.T                                    # (C, Cr)
    fh_rep = jnp.tile(WFh.T, (1, W))               # (Cr, W*C)  F_h, replicated over w
    sc0 = Wsc0.T                                   # (C, Cr)
    sc1_rep = jnp.tile(Wsc1.T, (1, W))             # (Cr, W*C)  scale conv1, replicated
    bd1 = jnp.kron(eye_w, W1x1.T)                  # (W*C, W*Cr) block-diag conv_1x1
    bdfw = jnp.kron(eye_w, WFw.T)                  # (W*Cr, W*C) block-diag F_w
    bdsh0 = jnp.kron(eye_w, Wsh0.T)                # (W*C, W*Cr) block-diag shift conv0
    bdsh1 = jnp.kron(eye_w, Wsh1.T)                # (W*Cr, W*C) block-diag shift conv1
    return (pool, w1, fh_rep, sc0, sc1_rep, bd1, bdfw, bdsh0, bdsh1)


def sftca_pallas(x_nchw, weights, *, target_block_bytes=1 << 20):
    """x_nchw: (B, C, H, W) float32; weights: PyTorch-layout 1x1 conv weights
    (W1x1, WFh, WFw, Wsc0, Wsc1, Wsh0, Wsh1)."""
    B, C, H, W = x_nchw.shape
    WC = W * C

    # Lane-dense NHWC view with (W, C) merged: minor dim W*C is a multiple of
    # 128 for typical shapes -> unmasked vector stores on the output path.
    x = jnp.transpose(x_nchw, (0, 2, 3, 1)).reshape(B, H, WC)
    params = _prep_params(weights, W)

    per_image_bytes = H * WC * x.dtype.itemsize
    TB = _pick_tb(B, per_image_bytes, target_block_bytes)
    grid = (B // TB,)
    block_bytes = TB * per_image_bytes
    # Double-buffered in/out blocks + live f32 intermediates + weights; keep it
    # >= the v6e scoped default (32 MiB) and safely under v7x's 64 MiB physical.
    vmem_limit = int(min(max(32 << 20, 12 * block_bytes + (2 << 20)), 48 << 20))

    def full_spec(shape):
        nd = len(shape)
        return pl.BlockSpec(shape, lambda b, _nd=nd: (0,) * _nd)

    data_spec = pl.BlockSpec((TB, H, WC), lambda b: (b, 0, 0))

    out = pl.pallas_call(
        sftca_kernel,
        out_shape=jax.ShapeDtypeStruct((B, H, WC), x.dtype),
        grid_spec=pltpu.PrefetchScalarGridSpec(
            num_scalar_prefetch=0,
            grid=grid,
            in_specs=[data_spec] + [full_spec(p.shape) for p in params],
            out_specs=data_spec,
        ),
        compiler_params=pltpu.CompilerParams(
            dimension_semantics=("parallel",),
            vmem_limit_bytes=vmem_limit,
        ),
    )(x, *params)

    return jnp.transpose(out.reshape(B, H, W, C), (0, 3, 1, 2))


# ----------------------------------------------------------------------------
# Pure-JAX reference (faithful, HIGHEST-precision) mirroring the PyTorch forward
# ----------------------------------------------------------------------------
def sftca_ref(x, W1x1, Wfh, Wfw, Wsc0, Wsc1, Wsh0, Wsh1):
    B, C, H, W = x.shape
    x_h = jnp.mean(x, axis=3)                          # (B, C, H)   pool over W
    x_w = jnp.mean(x, axis=2)                          # (B, C, W)   pool over H
    gap = jnp.mean(x, axis=(2, 3))                     # (B, C)
    cat = jnp.concatenate([x_h, x_w], axis=2)          # (B, C, H+W)
    y = jax.nn.relu(jnp.einsum('bcl,rc->brl', cat, W1x1, precision=HIGH))
    s_h = jax.nn.sigmoid(jnp.einsum('brh,cr->bch', y[:, :, :H], Wfh, precision=HIGH))
    s_w = jax.nn.sigmoid(jnp.einsum('brw,cr->bcw', y[:, :, H:], Wfw, precision=HIGH))
    t = jnp.einsum('bc,rc->br', gap, Wsc0, precision=HIGH)
    t = jnp.where(t >= 0, t, 0.1 * t)
    scale = jax.nn.sigmoid(jnp.einsum('br,cr->bc', t, Wsc1, precision=HIGH))
    u = jnp.einsum('bchw,rc->brhw', x, Wsh0, precision=HIGH)
    u = jnp.where(u >= 0, u, 0.1 * u)
    shift = jnp.einsum('brhw,cr->bchw', u, Wsh1, precision=HIGH)
    shift = (x + shift) * scale[:, :, None, None]
    return x * s_h[:, :, :, None] * s_w[:, :, None, :] * shift


if __name__ == "__main__":
    B, C, H, W = 2, 64, 8, 8
    reduction = 16
    Cr = C // reduction

    key = jax.random.PRNGKey(0)
    keys = jax.random.split(key, 8)
    x_nchw = jax.random.normal(keys[0], (B, C, H, W), dtype=jnp.float32)

    # Deterministic synthetic weights, PyTorch layout (Cout, Cin) for 1x1 convs.
    W1x1 = 0.1 * jax.random.normal(keys[1], (Cr, C), dtype=jnp.float32)
    WFh  = 0.1 * jax.random.normal(keys[2], (C, Cr), dtype=jnp.float32)
    WFw  = 0.1 * jax.random.normal(keys[3], (C, Cr), dtype=jnp.float32)
    Wsc0 = 0.1 * jax.random.normal(keys[4], (Cr, C), dtype=jnp.float32)
    Wsc1 = 0.1 * jax.random.normal(keys[5], (C, Cr), dtype=jnp.float32)
    Wsh0 = 0.1 * jax.random.normal(keys[6], (Cr, C), dtype=jnp.float32)
    Wsh1 = 0.1 * jax.random.normal(keys[7], (C, Cr), dtype=jnp.float32)

    out_nchw = sftca_pallas(x_nchw, (W1x1, WFh, WFw, Wsc0, Wsc1, Wsh0, Wsh1))
    out_nchw = jax.block_until_ready(out_nchw)

    ref = sftca_ref(x_nchw, W1x1, WFh, WFw, Wsc0, Wsc1, Wsh0, Wsh1)
    ref = jax.block_until_ready(ref)

    # Kernel uses default (single-pass) MXU precision with f32 accumulation;
    # the reference runs at HIGHEST, so compare with a moderate tolerance.
    np.testing.assert_allclose(np.asarray(out_nchw), np.asarray(ref),
                               rtol=2e-2, atol=2e-2)
    print("KERNEL_OK")
</pallas_src>

<mosaic_0001>
module attributes {stable_mosaic.version = 11 : i64} {
  func.func @sftca_kernel(%arg0: i32, %arg1: memref<1x8x512xf32, #tpu.memory_space<vmem>>, %arg2: memref<512x64xf32, #tpu.memory_space<vmem>>, %arg3: memref<64x4xf32, #tpu.memory_space<vmem>>, %arg4: memref<4x512xf32, #tpu.memory_space<vmem>>, %arg5: memref<64x4xf32, #tpu.memory_space<vmem>>, %arg6: memref<4x512xf32, #tpu.memory_space<vmem>>, %arg7: memref<512x32xf32, #tpu.memory_space<vmem>>, %arg8: memref<32x512xf32, #tpu.memory_space<vmem>>, %arg9: memref<512x32xf32, #tpu.memory_space<vmem>>, %arg10: memref<32x512xf32, #tpu.memory_space<vmem>>, %arg11: memref<1x8x512xf32, #tpu.memory_space<vmem>>) attributes {dimension_semantics = [#tpu.dimension_semantics<parallel>], iteration_bounds = array<i64: 2>, scalar_prefetch = 0 : i64, scratch_operands = 0 : i64, tpu.core_type = #tpu.core_type<tc>, window_params = [{transform_indices = @transform_0, window_bounds = array<i64: 1, 8, 512>}, {pipeline_mode = #tpu.pipeline_mode<synchronous>, transform_indices = @transform_1, window_bounds = array<i64: 512, 64>}, {pipeline_mode = #tpu.pipeline_mode<synchronous>, transform_indices = @transform_2, window_bounds = array<i64: 64, 4>}, {pipeline_mode = #tpu.pipeline_mode<synchronous>, transform_indices = @transform_3, window_bounds = array<i64: 4, 512>}, {pipeline_mode = #tpu.pipeline_mode<synchronous>, transform_indices = @transform_4, window_bounds = array<i64: 64, 4>}, {pipeline_mode = #tpu.pipeline_mode<synchronous>, transform_indices = @transform_5, window_bounds = array<i64: 4, 512>}, {pipeline_mode = #tpu.pipeline_mode<synchronous>, transform_indices = @transform_6, window_bounds = array<i64: 512, 32>}, {pipeline_mode = #tpu.pipeline_mode<synchronous>, transform_indices = @transform_7, window_bounds = array<i64: 32, 512>}, {pipeline_mode = #tpu.pipeline_mode<synchronous>, transform_indices = @transform_8, window_bounds = array<i64: 512, 32>}, {pipeline_mode = #tpu.pipeline_mode<synchronous>, transform_indices = @transform_9, window_bounds = array<i64: 32, 512>}, {transform_indices = @transform_10, window_bounds = array<i64: 1, 8, 512>}]} {
    %c0 = arith.constant 0 : index
    %c0_0 = arith.constant 0 : index
    %c0_1 = arith.constant 0 : index
    %0 = vector.load %arg1[%c0, %c0_0, %c0_1] : memref<1x8x512xf32, #tpu.memory_space<vmem>>, vector<1x8x512xf32>
    %1 = vector.shape_cast %0 : vector<1x8x512xf32> to vector<8x512xf32>
    %c0_2 = arith.constant 0 : index
    %c0_3 = arith.constant 0 : index
    %2 = vector.load %arg2[%c0_2, %c0_3] : memref<512x64xf32, #tpu.memory_space<vmem>>, vector<512x64xf32>
    %cst = arith.constant dense<0.000000e+00> : vector<8x64xf32>
    %3 = tpu.matmul %1, %2, %cst {dimension_numbers = #tpu.dot_dimension_numbers<[1], [0], [0], [1], [0, 0, 1, 1], [], []>} : vector<8x512xf32>, vector<512x64xf32>, vector<8x64xf32> -> vector<8x64xf32>
    %cst_4 = arith.constant dense<0.000000e+00> : vector<1x512xf32>
    %4 = vector.multi_reduction <add>, %0, %cst_4 [1] : vector<1x8x512xf32> to vector<1x512xf32>
    %cst_5 = arith.constant 8.000000e+00 : f32
    %5 = vector.broadcast %cst_5 : f32 to vector<1x512xf32>
    %6 = arith.divf %4, %5 : vector<1x512xf32>
    %c0_6 = arith.constant 0 : index
    %c0_7 = arith.constant 0 : index
    %7 = vector.load %arg2[%c0_6, %c0_7] : memref<512x64xf32, #tpu.memory_space<vmem>>, vector<512x64xf32>
    %cst_8 = arith.constant dense<0.000000e+00> : vector<1x64xf32>
    %8 = tpu.matmul %6, %7, %cst_8 {dimension_numbers = #tpu.dot_dimension_numbers<[1], [0], [0], [1], [0, 0, 1, 1], [], []>} : vector<1x512xf32>, vector<512x64xf32>, vector<1x64xf32> -> vector<1x64xf32>
    %c0_9 = arith.constant 0 : index
    %c0_10 = arith.constant 0 : index
    %9 = vector.load %arg3[%c0_9, %c0_10] : memref<64x4xf32, #tpu.memory_space<vmem>>, vector<64x4xf32>
    %cst_11 = arith.constant dense<0.000000e+00> : vector<8x4xf32>
    %10 = tpu.matmul %3, %9, %cst_11 {dimension_numbers = #tpu.dot_dimension_numbers<[1], [0], [0], [1], [0, 0, 1, 1], [], []>} : vector<8x64xf32>, vector<64x4xf32>, vector<8x4xf32> -> vector<8x4xf32>
    %cst_12 = arith.constant 0.000000e+00 : f32
    %11 = vector.broadcast %cst_12 : f32 to vector<8x4xf32>
    %12 = arith.maximumf %10, %11 : vector<8x4xf32>
    %c0_13 = arith.constant 0 : index
    %c0_14 = arith.constant 0 : index
    %13 = vector.load %arg4[%c0_13, %c0_14] : memref<4x512xf32, #tpu.memory_space<vmem>>, vector<4x512xf32>
    %cst_15 = arith.constant dense<0.000000e+00> : vector<8x512xf32>
    %14 = tpu.matmul %12, %13, %cst_15 {dimension_numbers = #tpu.dot_dimension_numbers<[1], [0], [0], [1], [0, 0, 1, 1], [], []>} : vector<8x4xf32>, vector<4x512xf32>, vector<8x512xf32> -> vector<8x512xf32>
    %15 = arith.negf %14 : vector<8x512xf32>
    %16 = math.exp %15 : vector<8x512xf32>
    %cst_16 = arith.constant 1.000000e+00 : f32
    %17 = vector.broadcast %cst_16 : f32 to vector<8x512xf32>
    %18 = arith.addf %17, %16 : vector<8x512xf32>
    %19 = arith.divf %17, %18 : vector<8x512xf32>
    %c0_17 = arith.constant 0 : index
    %c0_18 = arith.constant 0 : index
    %20 = vector.load %arg7[%c0_17, %c0_18] : memref<512x32xf32, #tpu.memory_space<vmem>>, vector<512x32xf32>
    %cst_19 = arith.constant dense<0.000000e+00> : vector<1x32xf32>
    %21 = tpu.matmul %6, %20, %cst_19 {dimension_numbers = #tpu.dot_dimension_numbers<[1], [0], [0], [1], [0, 0, 1, 1], [], []>} : vector<1x512xf32>, vector<512x32xf32>, vector<1x32xf32> -> vector<1x32xf32>
    %cst_20 = arith.constant 0.000000e+00 : f32
    %22 = vector.broadcast %cst_20 : f32 to vector<1x32xf32>
    %23 = arith.maximumf %21, %22 : vector<1x32xf32>
    %c0_21 = arith.constant 0 : index
    %c0_22 = arith.constant 0 : index
    %24 = vector.load %arg8[%c0_21, %c0_22] : memref<32x512xf32, #tpu.memory_space<vmem>>, vector<32x512xf32>
    %cst_23 = arith.constant dense<0.000000e+00> : vector<1x512xf32>
    %25 = tpu.matmul %23, %24, %cst_23 {dimension_numbers = #tpu.dot_dimension_numbers<[1], [0], [0], [1], [0, 0, 1, 1], [], []>} : vector<1x32xf32>, vector<32x512xf32>, vector<1x512xf32> -> vector<1x512xf32>
    %26 = arith.negf %25 : vector<1x512xf32>
    %27 = math.exp %26 : vector<1x512xf32>
    %cst_24 = arith.constant 1.000000e+00 : f32
    %28 = vector.broadcast %cst_24 : f32 to vector<1x512xf32>
    %29 = arith.addf %28, %27 : vector<1x512xf32>
    %30 = arith.divf %28, %29 : vector<1x512xf32>
    %c0_25 = arith.constant 0 : index
    %c0_26 = arith.constant 0 : index
    %31 = vector.load %arg5[%c0_25, %c0_26] : memref<64x4xf32, #tpu.memory_space<vmem>>, vector<64x4xf32>
    %cst_27 = arith.constant dense<0.000000e+00> : vector<1x4xf32>
    %32 = tpu.matmul %8, %31, %cst_27 {dimension_numbers = #tpu.dot_dimension_numbers<[1], [0], [0], [1], [0, 0, 1, 1], [], []>} : vector<1x64xf32>, vector<64x4xf32>, vector<1x4xf32> -> vector<1x4xf32>
    %cst_28 = arith.constant 0.000000e+00 : f32
    %33 = vector.broadcast %cst_28 : f32 to vector<1x4xf32>
    %34 = arith.cmpf oge, %32, %33 : vector<1x4xf32>
    %cst_29 = arith.constant 1.000000e-01 : f32
    %35 = vector.broadcast %cst_29 : f32 to vector<1x4xf32>
    %36 = arith.mulf %35, %32 : vector<1x4xf32>
    %37 = arith.select %34, %32, %36 : vector<1x4xi1>, vector<1x4xf32>
    %c0_30 = arith.constant 0 : index
    %c0_31 = arith.constant 0 : index
    %38 = vector.load %arg6[%c0_30, %c0_31] : memref<4x512xf32, #tpu.memory_space<vmem>>, vector<4x512xf32>
    %cst_32 = arith.constant dense<0.000000e+00> : vector<1x512xf32>
    %39 = tpu.matmul %37, %38, %cst_32 {dimension_numbers = #tpu.dot_dimension_numbers<[1], [0], [0], [1], [0, 0, 1, 1], [], []>} : vector<1x4xf32>, vector<4x512xf32>, vector<1x512xf32> -> vector<1x512xf32>
    %40 = arith.negf %39 : vector<1x512xf32>
    %41 = math.exp %40 : vector<1x512xf32>
    %cst_33 = arith.constant 1.000000e+00 : f32
    %42 = vector.broadcast %cst_33 : f32 to vector<1x512xf32>
    %43 = arith.addf %42, %41 : vector<1x512xf32>
    %44 = arith.divf %42, %43 : vector<1x512xf32>
    %c0_34 = arith.constant 0 : index
    %c0_35 = arith.constant 0 : index
    %45 = vector.load %arg9[%c0_34, %c0_35] : memref<512x32xf32, #tpu.memory_space<vmem>>, vector<512x32xf32>
    %cst_36 = arith.constant dense<0.000000e+00> : vector<8x32xf32>
    %46 = tpu.matmul %1, %45, %cst_36 {dimension_numbers = #tpu.dot_dimension_numbers<[1], [0], [0], [1], [0, 0, 1, 1], [], []>} : vector<8x512xf32>, vector<512x32xf32>, vector<8x32xf32> -> vector<8x32xf32>
    %cst_37 = arith.constant 0.000000e+00 : f32
    %47 = vector.broadcast %cst_37 : f32 to vector<8x32xf32>
    %48 = arith.cmpf oge, %46, %47 : vector<8x32xf32>
    %cst_38 = arith.constant 1.000000e-01 : f32
    %49 = vector.broadcast %cst_38 : f32 to vector<8x32xf32>
    %50 = arith.mulf %49, %46 : vector<8x32xf32>
    %51 = arith.select %48, %46, %50 : vector<8x32xi1>, vector<8x32xf32>
    %c0_39 = arith.constant 0 : index
    %c0_40 = arith.constant 0 : index
    %52 = vector.load %arg10[%c0_39, %c0_40] : memref<32x512xf32, #tpu.memory_space<vmem>>, vector<32x512xf32>
    %cst_41 = arith.constant dense<0.000000e+00> : vector<8x512xf32>
    %53 = tpu.matmul %51, %52, %cst_41 {dimension_numbers = #tpu.dot_dimension_numbers<[1], [0], [0], [1], [0, 0, 1, 1], [], []>} : vector<8x32xf32>, vector<32x512xf32>, vector<8x512xf32> -> vector<8x512xf32>
    %54 = arith.mulf %1, %19 : vector<8x512xf32>
    %55 = arith.addf %1, %53 : vector<8x512xf32>
    %56 = arith.mulf %54, %55 : vector<8x512xf32>
    %57 = arith.mulf %30, %44 : vector<1x512xf32>
    %58 = vector.shape_cast %56 : vector<8x512xf32> to vector<1x8x512xf32>
    %59 = vector.shape_cast %57 : vector<1x512xf32> to vector<1x1x512xf32>
    %60 = vector.broadcast %59 : vector<1x1x512xf32> to vector<1x8x512xf32>
    %61 = arith.mulf %58, %60 : vector<1x8x512xf32>
    %c0_42 = arith.constant 0 : index
    %c0_43 = arith.constant 0 : index
    %c0_44 = arith.constant 0 : index
    %62 = vector.load %arg11[%c0_42, %c0_43, %c0_44] : memref<1x8x512xf32, #tpu.memory_space<vmem>>, vector<1x8x512xf32>
    tpu.vector_store %arg11[%c0_42, %c0_43, %c0_44], %61 {strides = array<i32>} : memref<1x8x512xf32, #tpu.memory_space<vmem>>, vector<1x8x512xf32>,
    return
  }
  func.func @transform_0(%arg0: i32) -> (i32, i32, i32) {
    %c0_i32 = arith.constant 0 : i32
    %c0_i32_0 = arith.constant 0 : i32
    %c0_i32_1 = arith.constant 0 : i32
    return %arg0, %c0_i32, %c0_i32_0 : i32, i32, i32
  }
  func.func @transform_1(%arg0: i32) -> (i32, i32) {
    %c0_i32 = arith.constant 0 : i32
    %c0_i32_0 = arith.constant 0 : i32
    %c0_i32_1 = arith.constant 0 : i32
    return %c0_i32, %c0_i32_0 : i32, i32
  }
  func.func @transform_2(%arg0: i32) -> (i32, i32) {
    %c0_i32 = arith.constant 0 : i32
    %c0_i32_0 = arith.constant 0 : i32
    %c0_i32_1 = arith.constant 0 : i32
    return %c0_i32, %c0_i32_0 : i32, i32
  }
  func.func @transform_3(%arg0: i32) -> (i32, i32) {
    %c0_i32 = arith.constant 0 : i32
    %c0_i32_0 = arith.constant 0 : i32
    %c0_i32_1 = arith.constant 0 : i32
    return %c0_i32, %c0_i32_0 : i32, i32
  }
  func.func @transform_4(%arg0: i32) -> (i32, i32) {
    %c0_i32 = arith.constant 0 : i32
    %c0_i32_0 = arith.constant 0 : i32
    %c0_i32_1 = arith.constant 0 : i32
    return %c0_i32, %c0_i32_0 : i32, i32
  }
  func.func @transform_5(%arg0: i32) -> (i32, i32) {
    %c0_i32 = arith.constant 0 : i32
    %c0_i32_0 = arith.constant 0 : i32
    %c0_i32_1 = arith.constant 0 : i32
    return %c0_i32, %c0_i32_0 : i32, i32
  }
  func.func @transform_6(%arg0: i32) -> (i32, i32) {
    %c0_i32 = arith.constant 0 : i32
    %c0_i32_0 = arith.constant 0 : i32
    %c0_i32_1 = arith.constant 0 : i32
    return %c0_i32, %c0_i32_0 : i32, i32
  }
  func.func @transform_7(%arg0: i32) -> (i32, i32) {
    %c0_i32 = arith.constant 0 : i32
    %c0_i32_0 = arith.constant 0 : i32
    %c0_i32_1 = arith.constant 0 : i32
    return %c0_i32, %c0_i32_0 : i32, i32
  }
  func.func @transform_8(%arg0: i32) -> (i32, i32) {
    %c0_i32 = arith.constant 0 : i32
    %c0_i32_0 = arith.constant 0 : i32
    %c0_i32_1 = arith.constant 0 : i32
    return %c0_i32, %c0_i32_0 : i32, i32
  }
  func.func @transform_9(%arg0: i32) -> (i32, i32) {
    %c0_i32 = arith.constant 0 : i32
    %c0_i32_0 = arith.constant 0 : i32
    %c0_i32_1 = arith.constant 0 : i32
    return %c0_i32, %c0_i32_0 : i32, i32
  }
  func.func @transform_10(%arg0: i32) -> (i32, i32, i32) {
    %c0_i32 = arith.constant 0 : i32
    %c0_i32_0 = arith.constant 0 : i32
    %c0_i32_1 = arith.constant 0 : i32
    return %arg0, %c0_i32, %c0_i32_0 : i32, i32, i32
  }
}

</mosaic_0001>

<llo_original>
// kernel: tpu_custom_call.1
$region0: #{tpu_custom_call.1}
  #allocation0 [shape = 'u32[]', space=smem, size = 0x4, offset = 0x4, fixed_abs, tag = 'smem constant byte address 0x4 - core index']
  #allocation1 [shape = 'u32[144,128]{1,0:T(1,128)}', space=vmem, size = 0x12000, scoped, tag = 'internal scratch']
  %s0 = inlined_call_operand.vmem [shape: f32[2,8,512], index: 0, kind: input, shape index: {}]
  %s1 = inlined_call_operand.vmem [shape: f32[512,64], index: 1, kind: input, shape index: {}]
  %s2 = inlined_call_operand.vmem [shape: f32[64,4], index: 2, kind: input, shape index: {}]
  %s3 = inlined_call_operand.vmem [shape: f32[4,512], index: 3, kind: input, shape index: {}]
  %s4 = inlined_call_operand.vmem [shape: f32[64,4], index: 4, kind: input, shape index: {}]
  %s5 = inlined_call_operand.vmem [shape: f32[4,512], index: 5, kind: input, shape index: {}]
  %s6 = inlined_call_operand.vmem [shape: f32[512,32], index: 6, kind: input, shape index: {}]
  %s7 = inlined_call_operand.vmem [shape: f32[32,512], index: 7, kind: input, shape index: {}]
  %s8 = inlined_call_operand.vmem [shape: f32[512,32], index: 8, kind: input, shape index: {}]
  %s9 = inlined_call_operand.vmem [shape: f32[32,512], index: 9, kind: input, shape index: {}]
  %s10 = inlined_call_operand.hbm [shape: f32[2,8,512], index: 10, kind: output, shape index: {}]
  %s11 = sld [smem:[#allocation0]]
  $region73: #{tpu_custom_call.1} parent=0
    _
  %s13 = ssub.s32 1, %s11
  %s14 = scalar_select 0, %s13, %s11
  $region1: #{tpu_custom_call.1} parent=0
    #allocation2 [shape = 'u8[32768]{0}', space=vmem, size = 0x8000, scoped, tag = 'output window, operand 0']
    #allocation3 [shape = 's32[2]{0}', space=sflag, size = 0x8, scoped, tag = 'scoped memory for tpu_custom_call.1']
    %15 = vsyncpa [#allocation3], 0
    %s16 = scalar_lea.sflag [#allocation3], 1
    %17 = vsyncpa %s16, 0
    loop: start=0, step=1, limit=4
    $region2: #{tpu_custom_call.1} parent=1 // loop_pre_header
      _
    $region3: #{tpu_custom_call.1} parent=1 // loop_header
      %s19 = sphi 0, %s23
      %p20 = scmp.ge.s32.totalorder %s19, 4
      %s29 = sphi 0, %s31
      %s32 = sphi 0, %s29
      %s33 = sphi 0, %s32
      %s49 = sphi 0, %s33
      %s53 = sphi 0, %s53
      %s55 = sphi 0, %s53
      %s56 = sphi 0, %s55
      %s70 = sphi 0, %s56
      %s74 = sphi 0, %s74
      %s76 = sphi 0, %s74
      %s77 = sphi 0, %s76
      %s91 = sphi 0, %s77
      %s95 = sphi 0, %s95
      %s97 = sphi 0, %s95
      %s98 = sphi 0, %s97
      %s112 = sphi 0, %s98
      %s116 = sphi 0, %s116
      %s118 = sphi 0, %s116
      %s119 = sphi 0, %s118
      %s133 = sphi 0, %s119
      %s137 = sphi 0, %s137
      %s139 = sphi 0, %s137
      %s140 = sphi 0, %s139
      %s154 = sphi 0, %s140
      %s158 = sphi 0, %s158
      %s160 = sphi 0, %s158
      %s161 = sphi 0, %s160
      %s175 = sphi 0, %s161
      %s179 = sphi 0, %s179
      %s181 = sphi 0, %s179
      %s182 = sphi 0, %s181
      %s196 = sphi 0, %s182
      %s200 = sphi 0, %s200
      %s202 = sphi 0, %s200
      %s203 = sphi 0, %s202
      %s217 = sphi 0, %s203
      %s221 = sphi 0, %s221
      %s223 = sphi 0, %s221
      %s224 = sphi 0, %s223
      %s238 = sphi 0, %s224
      %s244 = sphi 0, %s246
      %s247 = sphi 0, %s244
      %s248 = sphi 0, %s247
      %s264 = sphi 0, %s248
    $region4: #{tpu_custom_call.1} parent=1 // loop_header_branch
      %22 = sbr.rel (%p20) target = $region8
    $region5: #{tpu_custom_call.1} parent=1 // loop_body
      %s24 = ssub.s32 %s19, 1
      %s25 = ssub.s32 %s19, 2
      %s26 = sadd.s32 %s19, 1
      %s27 = ssub.s32 %s19, %s26
      %p28 = scmp.eq.s32.totalorder %s27, 0
      %s30 = sadd.s32 %s29, 1
      %s31 = scalar_select %p28, %s29, %s30
      %p34 = pneg %p28
      %p35 = scmp.eq.s32.totalorder %s19, 1
      %p36 = por %p34, %p35
      %p37 = scmp.ne.s32.totalorder %s29, %s32
      %p38 = scmp.eq.s32.totalorder %s19, 0
      %p39 = por %p37, %p38
      %p40 = scmp.ne.s32.totalorder %s29, %s32
      %p41 = scmp.eq.s32.totalorder %s24, 1
      %p42 = por %p40, %p41
      %p43 = scmp.ne.s32.totalorder %s32, %s33
      %p44 = scmp.eq.s32.totalorder %s24, 0
      %p45 = por %p43, %p44
      %p46 = scmp.ne.s32.totalorder %s32, %s33
      %p47 = scmp.eq.s32.totalorder %s25, 1
      %p48 = por %p46, %p47
      %p50 = scmp.ne.s32.totalorder %s33, %s49
      %p51 = scmp.eq.s32.totalorder %s25, 0
      %p52 = por %p50, %p51
      %s54 = sadd.s32 %s53, 1
      %p57 = scmp.eq.s32.totalorder %s19, 1
      %p58 = scmp.ne.s32.totalorder %s53, %s55
      %p59 = scmp.eq.s32.totalorder %s19, 0
      %p60 = por %p58, %p59
      %p61 = scmp.ne.s32.totalorder %s53, %s55
      %p62 = scmp.eq.s32.totalorder %s24, 1
      %p63 = por %p61, %p62
      %p64 = scmp.ne.s32.totalorder %s55, %s56
      %p65 = scmp.eq.s32.totalorder %s24, 0
      %p66 = por %p64, %p65
      %p67 = scmp.ne.s32.totalorder %s55, %s56
      %p68 = scmp.eq.s32.totalorder %s25, 1
      %p69 = por %p67, %p68
      %p71 = scmp.ne.s32.totalorder %s56, %s70
      %p72 = scmp.eq.s32.totalorder %s25, 0
      %p73 = por %p71, %p72
      %s75 = sadd.s32 %s74, 1
      %p78 = scmp.eq.s32.totalorder %s19, 1
      %p79 = scmp.ne.s32.totalorder %s74, %s76
      %p80 = scmp.eq.s32.totalorder %s19, 0
      %p81 = por %p79, %p80
      %p82 = scmp.ne.s32.totalorder %s74, %s76
      %p83 = scmp.eq.s32.totalorder %s24, 1
      %p84 = por %p82, %p83
      %p85 = scmp.ne.s32.totalorder %s76, %s77
      %p86 = scmp.eq.s32.totalorder %s24, 0
      %p87 = por %p85, %p86
      %p88 = scmp.ne.s32.totalorder %s76, %s77
      %p89 = scmp.eq.s32.totalorder %s25, 1
      %p90 = por %p88, %p89
      %p92 = scmp.ne.s32.totalorder %s77, %s91
      %p93 = scmp.eq.s32.totalorder %s25, 0
      %p94 = por %p92, %p93
      %s96 = sadd.s32 %s95, 1
      %p99 = scmp.eq.s32.totalorder %s19, 1
      %p100 = scmp.ne.s32.totalorder %s95, %s97
      %p101 = scmp.eq.s32.totalorder %s19, 0
      %p102 = por %p100, %p101
      %p103 = scmp.ne.s32.totalorder %s95, %s97
      %p104 = scmp.eq.s32.totalorder %s24, 1
      %p105 = por %p103, %p104
      %p106 = scmp.ne.s32.totalorder %s97, %s98
      %p107 = scmp.eq.s32.totalorder %s24, 0
      %p108 = por %p106, %p107
      %p109 = scmp.ne.s32.totalorder %s97, %s98
      %p110 = scmp.eq.s32.totalorder %s25, 1
      %p111 = por %p109, %p110
      %p113 = scmp.ne.s32.totalorder %s98, %s112
      %p114 = scmp.eq.s32.totalorder %s25, 0
      %p115 = por %p113, %p114
      %s117 = sadd.s32 %s116, 1
      %p120 = scmp.eq.s32.totalorder %s19, 1
      %p121 = scmp.ne.s32.totalorder %s116, %s118
      %p122 = scmp.eq.s32.totalorder %s19, 0
      %p123 = por %p121, %p122
      %p124 = scmp.ne.s32.totalorder %s116, %s118
      %p125 = scmp.eq.s32.totalorder %s24, 1
      %p126 = por %p124, %p125
      %p127 = scmp.ne.s32.totalorder %s118, %s119
      %p128 = scmp.eq.s32.totalorder %s24, 0
      %p129 = por %p127, %p128
      %p130 = scmp.ne.s32.totalorder %s118, %s119
      %p131 = scmp.eq.s32.totalorder %s25, 1
      %p132 = por %p130, %p131
      %p134 = scmp.ne.s32.totalorder %s119, %s133
      %p135 = scmp.eq.s32.totalorder %s25, 0
      %p136 = por %p134, %p135
      %s138 = sadd.s32 %s137, 1
      %p141 = scmp.eq.s32.totalorder %s19, 1
      %p142 = scmp.ne.s32.totalorder %s137, %s139
      %p143 = scmp.eq.s32.totalorder %s19, 0
      %p144 = por %p142, %p143
      %p145 = scmp.ne.s32.totalorder %s137, %s139
      %p146 = scmp.eq.s32.totalorder %s24, 1
      %p147 = por %p145, %p146
      %p148 = scmp.ne.s32.totalorder %s139, %s140
      %p149 = scmp.eq.s32.totalorder %s24, 0
      %p150 = por %p148, %p149
      %p151 = scmp.ne.s32.totalorder %s139, %s140
      %p152 = scmp.eq.s32.totalorder %s25, 1
      %p153 = por %p151, %p152
      %p155 = scmp.ne.s32.totalorder %s140, %s154
      %p156 = scmp.eq.s32.totalorder %s25, 0
      %p157 = por %p155, %p156
      %s159 = sadd.s32 %s158, 1
      %p162 = scmp.eq.s32.totalorder %s19, 1
      %p163 = scmp.ne.s32.totalorder %s158, %s160
      %p164 = scmp.eq.s32.totalorder %s19, 0
      %p165 = por %p163, %p164
      %p166 = scmp.ne.s32.totalorder %s158, %s160
      %p167 = scmp.eq.s32.totalorder %s24, 1
      %p168 = por %p166, %p167
      %p169 = scmp.ne.s32.totalorder %s160, %s161
      %p170 = scmp.eq.s32.totalorder %s24, 0
      %p171 = por %p169, %p170
      %p172 = scmp.ne.s32.totalorder %s160, %s161
      %p173 = scmp.eq.s32.totalorder %s25, 1
      %p174 = por %p172, %p173
      %p176 = scmp.ne.s32.totalorder %s161, %s175
      %p177 = scmp.eq.s32.totalorder %s25, 0
      %p178 = por %p176, %p177
      %s180 = sadd.s32 %s179, 1
      %p183 = scmp.eq.s32.totalorder %s19, 1
      %p184 = scmp.ne.s32.totalorder %s179, %s181
      %p185 = scmp.eq.s32.totalorder %s19, 0
      %p186 = por %p184, %p185
      %p187 = scmp.ne.s32.totalorder %s179, %s181
      %p188 = scmp.eq.s32.totalorder %s24, 1
      %p189 = por %p187, %p188
      %p190 = scmp.ne.s32.totalorder %s181, %s182
      %p191 = scmp.eq.s32.totalorder %s24, 0
      %p192 = por %p190, %p191
      %p193 = scmp.ne.s32.totalorder %s181, %s182
      %p194 = scmp.eq.s32.totalorder %s25, 1
      %p195 = por %p193, %p194
      %p197 = scmp.ne.s32.totalorder %s182, %s196
      %p198 = scmp.eq.s32.totalorder %s25, 0
      %p199 = por %p197, %p198
      %s201 = sadd.s32 %s200, 1
      %p204 = scmp.eq.s32.totalorder %s19, 1
      %p205 = scmp.ne.s32.totalorder %s200, %s202
      %p206 = scmp.eq.s32.totalorder %s19, 0
      %p207 = por %p205, %p206
      %p208 = scmp.ne.s32.totalorder %s200, %s202
      %p209 = scmp.eq.s32.totalorder %s24, 1
      %p210 = por %p208, %p209
      %p211 = scmp.ne.s32.totalorder %s202, %s203
      %p212 = scmp.eq.s32.totalorder %s24, 0
      %p213 = por %p211, %p212
      %p214 = scmp.ne.s32.totalorder %s202, %s203
      %p215 = scmp.eq.s32.totalorder %s25, 1
      %p216 = por %p214, %p215
      %p218 = scmp.ne.s32.totalorder %s203, %s217
      %p219 = scmp.eq.s32.totalorder %s25, 0
      %p220 = por %p218, %p219
      %s222 = sadd.s32 %s221, 1
      %p225 = scmp.eq.s32.totalorder %s19, 1
      %p226 = scmp.ne.s32.totalorder %s221, %s223
      %p227 = scmp.eq.s32.totalorder %s19, 0
      %p228 = por %p226, %p227
      %p229 = scmp.ne.s32.totalorder %s221, %s223
      %p230 = scmp.eq.s32.totalorder %s24, 1
      %p231 = por %p229, %p230
      %p232 = scmp.ne.s32.totalorder %s223, %s224
      %p233 = scmp.eq.s32.totalorder %s24, 0
      %p234 = por %p232, %p233
      %p235 = scmp.ne.s32.totalorder %s223, %s224
      %p236 = scmp.eq.s32.totalorder %s25, 1
      %p237 = por %p235, %p236
      %p239 = scmp.ne.s32.totalorder %s224, %s238
      %p240 = scmp.eq.s32.totalorder %s25, 0
      %p241 = por %p239, %p240
      %s242 = ssub.s32 %s19, %s26
      %p243 = scmp.eq.s32.totalorder %s242, 0
      %s245 = sadd.s32 %s244, 1
      %s246 = scalar_select %p243, %s244, %s245
      %p249 = pneg %p243
      %p250 = scmp.eq.s32.totalorder %s19, 1
      %p251 = por %p249, %p250
      %p252 = scmp.ne.s32.totalorder %s244, %s247
      %p253 = scmp.eq.s32.totalorder %s19, 0
      %p254 = por %p252, %p253
      %p255 = scmp.ne.s32.totalorder %s244, %s247
      %p256 = scmp.eq.s32.totalorder %s24, 1
      %p257 = por %p255, %p256
      %p258 = scmp.ne.s32.totalorder %s247, %s248
      %p259 = scmp.eq.s32.totalorder %s24, 0
      %p260 = por %p258, %p259
      %p261 = scmp.ne.s32.totalorder %s247, %s248
      %p262 = scmp.eq.s32.totalorder %s25, 1
      %p263 = por %p261, %p262
      %p265 = scmp.ne.s32.totalorder %s248, %s264
      %p266 = scmp.eq.s32.totalorder %s25, 0
      %p267 = por %p265, %p266
      %p268 = scmp.le.s32.totalorder 1, %s19
      %p269 = scmp.lt.s32.totalorder %s19, 3
      %p270 = pnand %p268, %p269
      %p271 = pneg %p270
      // Predicated region
      $region9: #{tpu_custom_call.1} parent=5 // pred_check
        _
      $region10: #{tpu_custom_call.1} parent=5 // pred_check_branch
        %273 = sbr.rel (%p270) target = $region12
      $region11: #{tpu_custom_call.1} parent=5 // pred_region
        %s274 = ssub.s32 %s19, 1
        // Predicated region
        $region13: #{tpu_custom_call.1} parent=11 // pred_check
          %p275 = pneg %p66
        $region14: #{tpu_custom_call.1} parent=11 // pred_check_branch
          %277 = sbr.rel (%p275) target = $region16
        $region15: #{tpu_custom_call.1} parent=11 // pred_region
          _
        $region16: #{tpu_custom_call.1} parent=11 // pred_fallthru
          _
        // Predicated region
        $region17: #{tpu_custom_call.1} parent=11 // pred_check
          %p278 = pneg %p87
        $region18: #{tpu_custom_call.1} parent=11 // pred_check_branch
          %280 = sbr.rel (%p278) target = $region20
        $region19: #{tpu_custom_call.1} parent=11 // pred_region
          _
        $region20: #{tpu_custom_call.1} parent=11 // pred_fallthru
          _
        // Predicated region
        $region21: #{tpu_custom_call.1} parent=11 // pred_check
          %p281 = pneg %p108
        $region22: #{tpu_custom_call.1} parent=11 // pred_check_branch
          %283 = sbr.rel (%p281) target = $region24
        $region23: #{tpu_custom_call.1} parent=11 // pred_region
          _
        $region24: #{tpu_custom_call.1} parent=11 // pred_fallthru
          _
        // Predicated region
        $region25: #{tpu_custom_call.1} parent=11 // pred_check
          %p284 = pneg %p129
        $region26: #{tpu_custom_call.1} parent=11 // pred_check_branch
          %286 = sbr.rel (%p284) target = $region28
        $region27: #{tpu_custom_call.1} parent=11 // pred_region
          _
        $region28: #{tpu_custom_call.1} parent=11 // pred_fallthru
          _
        // Predicated region
        $region29: #{tpu_custom_call.1} parent=11 // pred_check
          %p287 = pneg %p150
        $region30: #{tpu_custom_call.1} parent=11 // pred_check_branch
          %289 = sbr.rel (%p287) target = $region32
        $region31: #{tpu_custom_call.1} parent=11 // pred_region
          _
        $region32: #{tpu_custom_call.1} parent=11 // pred_fallthru
          _
        // Predicated region
        $region33: #{tpu_custom_call.1} parent=11 // pred_check
          %p290 = pneg %p171
        $region34: #{tpu_custom_call.1} parent=11 // pred_check_branch
          %292 = sbr.rel (%p290) target = $region36
        $region35: #{tpu_custom_call.1} parent=11 // pred_region
          _
        $region36: #{tpu_custom_call.1} parent=11 // pred_fallthru
          _
        // Predicated region
        $region37: #{tpu_custom_call.1} parent=11 // pred_check
          %p293 = pneg %p192
        $region38: #{tpu_custom_call.1} parent=11 // pred_check_branch
          %295 = sbr.rel (%p293) target = $region40
        $region39: #{tpu_custom_call.1} parent=11 // pred_region
          _
        $region40: #{tpu_custom_call.1} parent=11 // pred_fallthru
          _
        // Predicated region
        $region41: #{tpu_custom_call.1} parent=11 // pred_check
          %p296 = pneg %p213
        $region42: #{tpu_custom_call.1} parent=11 // pred_check_branch
          %298 = sbr.rel (%p296) target = $region44
        $region43: #{tpu_custom_call.1} parent=11 // pred_region
          _
        $region44: #{tpu_custom_call.1} parent=11 // pred_fallthru
          _
        // Predicated region
        $region45: #{tpu_custom_call.1} parent=11 // pred_check
          %p299 = pneg %p234
        $region46: #{tpu_custom_call.1} parent=11 // pred_check_branch
          %301 = sbr.rel (%p299) target = $region48
        $region47: #{tpu_custom_call.1} parent=11 // pred_region
          _
        $region48: #{tpu_custom_call.1} parent=11 // pred_fallthru
          _
      $region12: #{tpu_custom_call.1} parent=5 // pred_fallthru
        _
      %p302 = scmp.lt.s32.totalorder %s19, 2
      // Predicated region
      $region49: #{tpu_custom_call.1} parent=5 // pred_check
        %p303 = pneg %p302
      $region50: #{tpu_custom_call.1} parent=5 // pred_check_branch
        %305 = sbr.rel (%p303) target = $region52
      $region51: #{tpu_custom_call.1} parent=5 // pred_region
        // Predicated region
        $region53: #{tpu_custom_call.1} parent=51 // pred_check
          %p306 = pneg %p39
        $region54: #{tpu_custom_call.1} parent=51 // pred_check_branch
          %308 = sbr.rel (%p306) target = $region56
        $region55: #{tpu_custom_call.1} parent=51 // pred_region
          %p309 = scmp.lt.s32.totalorder %s19, 1
          %s310 = scalar_select %p309, %s19, 1
          %s311 = smul.addr %s310, 4
          %s312 = smul.addr %s311, 8
          %s313 = scalar_lea.vmem %s0, %s312
        $region56: #{tpu_custom_call.1} parent=51 // pred_fallthru
          _
      $region52: #{tpu_custom_call.1} parent=5 // pred_fallthru
        _
      %p314 = scmp.le.s32.totalorder 1, %s19
      %p315 = scmp.lt.s32.totalorder %s19, 3
      %p316 = pnand %p314, %p315
      %p317 = pneg %p316
      // Predicated region
      $region57: #{tpu_custom_call.1} parent=5 // pred_check
        _
      $region58: #{tpu_custom_call.1} parent=5 // pred_check_branch
        %319 = sbr.rel (%p316) target = $region60
      $region59: #{tpu_custom_call.1} parent=5 // pred_region
        %s320 = ssub.s32 %s19, 1
        %p321 = scmp.lt.s32.totalorder %s24, 1
        %s322 = scalar_select %p321, %s24, 1
        %s323 = smul.addr %s322, 4
        %s324 = smul.addr %s323, 8
        %s325 = scalar_lea.vmem %s0, %s324
        %p326 = pneg %p45
        %p327 = pneg %p42
        %p328 = pneg %p66
        %p329 = pneg %p63
        %p330 = pneg %p87
        %p331 = pneg %p84
        %p332 = pneg %p108
        %p333 = pneg %p105
        %p334 = pneg %p129
        %p335 = pneg %p126
        %p336 = pneg %p150
        %p337 = pneg %p147
        %p338 = pneg %p171
        %p339 = pneg %p168
        %p340 = pneg %p192
        %p341 = pneg %p189
        %p342 = pneg %p213
        %p343 = pneg %p210
        %p344 = pneg %p234
        %p345 = pneg %p231
        %p346 = pneg %p260
        %p347 = pneg %p257
        %s348 = sand.u32 %s247, 1
        %s349 = scalar_lea.sflag [#allocation3], %s348
        %s350 = sand.u32 %s247, 1
        %s351 = smul.addr %s350, 32
        %s352 = scalar_lea.vmem [#allocation2], %s351
        %p353 = scmp.lt.s32.totalorder %s24, 1
        %s354 = scalar_select %p353, %s24, 1
        %s355 = smul.addr %s354, 4
        %s356 = smul.addr %s355, 8
        %s357 = scalar_lea.vmem %s0, %s356
        %v358 = vld [vmem:[%s357] sm:$0xff]
        %v359 = vld [vmem:[%s357 + $0x8] sm:$0xff]
        %v360 = vld [vmem:[%s357 + $0x10] sm:$0xff]
        %v361 = vld [vmem:[%s357 + $0x18] sm:$0xff]
        %v362 = vld [vmem:[%s1] sm:$0xff]
        %v363 = vld [vmem:[%s1 + $0x8] sm:$0xff]
        %v364 = vld [vmem:[%s1 + $0x10] sm:$0xff]
        %v365 = vld [vmem:[%s1 + $0x18] sm:$0xff]
        %v366 = vld [vmem:[%s1 + $0x20] sm:$0xff]
        %v367 = vld [vmem:[%s1 + $0x28] sm:$0xff]
        %v368 = vld [vmem:[%s1 + $0x30] sm:$0xff]
        %v369 = vld [vmem:[%s1 + $0x38] sm:$0xff]
        %v370 = vld [vmem:[%s1 + $0x40] sm:$0xff]
        %v371 = vld [vmem:[%s1 + $0x48] sm:$0xff]
        %v372 = vld [vmem:[%s1 + $0x50] sm:$0xff]
        %v373 = vld [vmem:[%s1 + $0x58] sm:$0xff]
        %v374 = vld [vmem:[%s1 + $0x60] sm:$0xff]
        %v375 = vld [vmem:[%s1 + $0x68] sm:$0xff]
        %v376 = vld [vmem:[%s1 + $0x70] sm:$0xff]
        %v377 = vld [vmem:[%s1 + $0x78] sm:$0xff]
        %v378 = vld [vmem:[%s1 + $0x80] sm:$0xff]
        %v379 = vld [vmem:[%s1 + $0x88] sm:$0xff]
        %v380 = vld [vmem:[%s1 + $0x90] sm:$0xff]
        %v381 = vld [vmem:[%s1 + $0x98] sm:$0xff]
        %v382 = vld [vmem:[%s1 + $0xa0] sm:$0xff]
        %v383 = vld [vmem:[%s1 + $0xa8] sm:$0xff]
        %v384 = vld [vmem:[%s1 + $0xb0] sm:$0xff]
        %v385 = vld [vmem:[%s1 + $0xb8] sm:$0xff]
        %v386 = vld [vmem:[%s1 + $0xc0] sm:$0xff]
        %v387 = vld [vmem:[%s1 + $0xc8] sm:$0xff]
        %v388 = vld [vmem:[%s1 + $0xd0] sm:$0xff]
        %v389 = vld [vmem:[%s1 + $0xd8] sm:$0xff]
        %v390 = vld [vmem:[%s1 + $0xe0] sm:$0xff]
        %v391 = vld [vmem:[%s1 + $0xe8] sm:$0xff]
        %v392 = vld [vmem:[%s1 + $0xf0] sm:$0xff]
        %v393 = vld [vmem:[%s1 + $0xf8] sm:$0xff]
        %v394 = vld [vmem:[%s1 + $0x100] sm:$0xff]
        %v395 = vld [vmem:[%s1 + $0x108] sm:$0xff]
        %v396 = vld [vmem:[%s1 + $0x110] sm:$0xff]
        %v397 = vld [vmem:[%s1 + $0x118] sm:$0xff]
        %v398 = vld [vmem:[%s1 + $0x120] sm:$0xff]
        %v399 = vld [vmem:[%s1 + $0x128] sm:$0xff]
        %v400 = vld [vmem:[%s1 + $0x130] sm:$0xff]
        %v401 = vld [vmem:[%s1 + $0x138] sm:$0xff]
        %v402 = vld [vmem:[%s1 + $0x140] sm:$0xff]
        %v403 = vld [vmem:[%s1 + $0x148] sm:$0xff]
        %v404 = vld [vmem:[%s1 + $0x150] sm:$0xff]
        %v405 = vld [vmem:[%s1 + $0x158] sm:$0xff]
        %v406 = vld [vmem:[%s1 + $0x160] sm:$0xff]
        %v407 = vld [vmem:[%s1 + $0x168] sm:$0xff]
        %v408 = vld [vmem:[%s1 + $0x170] sm:$0xff]
        %v409 = vld [vmem:[%s1 + $0x178] sm:$0xff]
        %v410 = vld [vmem:[%s1 + $0x180] sm:$0xff]
        %v411 = vld [vmem:[%s1 + $0x188] sm:$0xff]
        %v412 = vld [vmem:[%s1 + $0x190] sm:$0xff]
        %v413 = vld [vmem:[%s1 + $0x198] sm:$0xff]
        %v414 = vld [vmem:[%s1 + $0x1a0] sm:$0xff]
        %v415 = vld [vmem:[%s1 + $0x1a8] sm:$0xff]
        %v416 = vld [vmem:[%s1 + $0x1b0] sm:$0xff]
        %v417 = vld [vmem:[%s1 + $0x1b8] sm:$0xff]
        %v418 = vld [vmem:[%s1 + $0x1c0] sm:$0xff]
        %v419 = vld [vmem:[%s1 + $0x1c8] sm:$0xff]
        %v420 = vld [vmem:[%s1 + $0x1d0] sm:$0xff]
        %v421 = vld [vmem:[%s1 + $0x1d8] sm:$0xff]
        %v422 = vld [vmem:[%s1 + $0x1e0] sm:$0xff]
        %v423 = vld [vmem:[%s1 + $0x1e8] sm:$0xff]
        %v424 = vld [vmem:[%s1 + $0x1f0] sm:$0xff]
        %v425 = vld [vmem:[%s1 + $0x1f8] sm:$0xff]
        %426 = vmatprep.subr.mxu0 0.0
        %427 = vmatpush1.msra.mxu0 %v377
        %428 = vmatprep.subr.mxu0 0.0
        %429 = vmatpush1.msra.mxu0 %v376
        %430 = vmatprep.subr.mxu0 0.0
        %431 = vmatpush1.msra.mxu0 %v375
        %432 = vmatprep.subr.mxu0 0.0
        %433 = vmatpush1.msra.mxu0 %v374
        %434 = vmatprep.subr.mxu0 0.0
        %435 = vmatpush1.msra.mxu0 %v373
        %436 = vmatprep.subr.mxu0 0.0
        %437 = vmatpush1.msra.mxu0 %v372
        %438 = vmatprep.subr.mxu0 0.0
        %439 = vmatpush1.msra.mxu0 %v371
        %440 = vmatprep.subr.mxu0 0.0
        %441 = vmatpush1.msra.mxu0 %v370
        %442 = vmatprep.subr.mxu0 0.0
        %443 = vmatpush1.msra.mxu0 %v369
        %444 = vmatprep.subr.mxu0 0.0
        %445 = vmatpush1.msra.mxu0 %v368
        %446 = vmatprep.subr.mxu0 0.0
        %447 = vmatpush1.msra.mxu0 %v367
        %448 = vmatprep.subr.mxu0 0.0
        %449 = vmatpush1.msra.mxu0 %v366
        %450 = vmatprep.subr.mxu0 0.0
        %451 = vmatpush1.msra.mxu0 %v365
        %452 = vmatprep.subr.mxu0 0.0
        %453 = vmatpush1.msra.mxu0 %v364
        %454 = vmatprep.subr.mxu0 0.0
        %455 = vmatpush1.msra.mxu0 %v363
        %456 = vmatprep.subr.mxu0 0.0
        %457 = vmatpush1.msra.mxu0 %v362
        %458 = vmatprep.subr.mxu0 0.0
        %459 = vmatpush2.msra.mxu0 %v393
        %460 = vmatprep.subr.mxu0 0.0
        %461 = vmatpush2.msra.mxu0 %v392
        %462 = vmatprep.subr.mxu0 0.0
        %463 = vmatpush2.msra.mxu0 %v391
        %464 = vmatprep.subr.mxu0 0.0
        %465 = vmatpush2.msra.mxu0 %v390
        %466 = vmatprep.subr.mxu0 0.0
        %467 = vmatpush2.msra.mxu0 %v389
        %468 = vmatprep.subr.mxu0 0.0
        %469 = vmatpush2.msra.mxu0 %v388
        %470 = vmatprep.subr.mxu0 0.0
        %471 = vmatpush2.msra.mxu0 %v387
        %472 = vmatprep.subr.mxu0 0.0
        %473 = vmatpush2.msra.mxu0 %v386
        %474 = vmatprep.subr.mxu0 0.0
        %475 = vmatpush2.msra.mxu0 %v385
        %476 = vmatprep.subr.mxu0 0.0
        %477 = vmatpush2.msra.mxu0 %v384
        %478 = vmatprep.subr.mxu0 0.0
        %479 = vmatpush2.msra.mxu0 %v383
        %480 = vmatprep.subr.mxu0 0.0
        %481 = vmatpush2.msra.mxu0 %v382
        %482 = vmatprep.subr.mxu0 0.0
        %483 = vmatpush2.msra.mxu0 %v381
        %484 = vmatprep.subr.mxu0 0.0
        %485 = vmatpush2.msra.mxu0 %v380
        %486 = vmatprep.subr.mxu0 0.0
        %487 = vmatpush2.msra.mxu0 %v379
        %488 = vmatprep.subr.mxu0 0.0
        %489 = vmatpush2.msra.mxu0 %v378
        %490 = vmatprep.mubr.f32.mxu0 %v359
        %491 = vmatmul.mubr.f32.gmra.mxu0 %v358
        %v492 = vpop.f32.mrf.mxu0
        %v493 = vadd.f32 0.0, %v492
        %v494 = vpop.f32.mrf.mxu0
        %495 = vdwg.mxu0
        %496 = vmatprep.subr.mxu0 0.0
        %497 = vmatpush1.msra.mxu0 %v409
        %498 = vmatprep.subr.mxu0 0.0
        %499 = vmatpush1.msra.mxu0 %v408
        %500 = vmatprep.subr.mxu0 0.0
        %501 = vmatpush1.msra.mxu0 %v407
        %502 = vmatprep.subr.mxu0 0.0
        %503 = vmatpush1.msra.mxu0 %v406
        %504 = vmatprep.subr.mxu0 0.0
        %505 = vmatpush1.msra.mxu0 %v405
        %506 = vmatprep.subr.mxu0 0.0
        %507 = vmatpush1.msra.mxu0 %v404
        %508 = vmatprep.subr.mxu0 0.0
        %509 = vmatpush1.msra.mxu0 %v403
        %510 = vmatprep.subr.mxu0 0.0
        %511 = vmatpush1.msra.mxu0 %v402
        %512 = vmatprep.subr.mxu0 0.0
        %513 = vmatpush1.msra.mxu0 %v401
        %514 = vmatprep.subr.mxu0 0.0
        %515 = vmatpush1.msra.mxu0 %v400
        %516 = vmatprep.subr.mxu0 0.0
        %517 = vmatpush1.msra.mxu0 %v399
        %518 = vmatprep.subr.mxu0 0.0
        %519 = vmatpush1.msra.mxu0 %v398
        %520 = vmatprep.subr.mxu0 0.0
        %521 = vmatpush1.msra.mxu0 %v397
        %522 = vmatprep.subr.mxu0 0.0
        %523 = vmatpush1.msra.mxu0 %v396
        %524 = vmatprep.subr.mxu0 0.0
        %525 = vmatpush1.msra.mxu0 %v395
        %526 = vmatprep.subr.mxu0 0.0
        %527 = vmatpush1.msra.mxu0 %v394
        %528 = vmatprep.subr.mxu0 0.0
        %529 = vmatpush2.msra.mxu0 %v425
        %530 = vmatprep.subr.mxu0 0.0
        %531 = vmatpush2.msra.mxu0 %v424
        %532 = vmatprep.subr.mxu0 0.0
        %533 = vmatpush2.msra.mxu0 %v423
        %534 = vmatprep.subr.mxu0 0.0
        %535 = vmatpush2.msra.mxu0 %v422
        %536 = vmatprep.subr.mxu0 0.0
        %537 = vmatpush2.msra.mxu0 %v421
        %538 = vmatprep.subr.mxu0 0.0
        %539 = vmatpush2.msra.mxu0 %v420
        %540 = vmatprep.subr.mxu0 0.0
        %541 = vmatpush2.msra.mxu0 %v419
        %542 = vmatprep.subr.mxu0 0.0
        %543 = vmatpush2.msra.mxu0 %v418
        %544 = vmatprep.subr.mxu0 0.0
        %545 = vmatpush2.msra.mxu0 %v417
        %546 = vmatprep.subr.mxu0 0.0
        %547 = vmatpush2.msra.mxu0 %v416
        %548 = vmatprep.subr.mxu0 0.0
        %549 = vmatpush2.msra.mxu0 %v415
        %550 = vmatprep.subr.mxu0 0.0
        %551 = vmatpush2.msra.mxu0 %v414
        %552 = vmatprep.subr.mxu0 0.0
        %553 = vmatpush2.msra.mxu0 %v413
        %554 = vmatprep.subr.mxu0 0.0
        %555 = vmatpush2.msra.mxu0 %v412
        %556 = vmatprep.subr.mxu0 0.0
        %557 = vmatpush2.msra.mxu0 %v411
        %558 = vmatprep.subr.mxu0 0.0
        %559 = vmatpush2.msra.mxu0 %v410
        %560 = vmatprep.mubr.f32.mxu0 %v361
        %561 = vmatmul.mubr.f32.gmra.mxu0 %v360
        %v562 = vpop.f32.mrf.mxu0
        %v563 = vadd.f32 %v493, %v562
        %v564 = vpop.f32.mrf.mxu0
        %565 = vdwg.mxu0
        %v566 = vrot.slane %v358, 4
        %v567 = vadd.f32 %v358, %v566
        %v568 = vrot.slane %v567, 2
        %v569 = vadd.f32 %v567, %v568
        %v570 = vrot.slane %v569, 1
        %v571 = vadd.f32 %v569, %v570
        %v572 = vrot.slane %v359, 4
        %v573 = vadd.f32 %v359, %v572
        %v574 = vrot.slane %v573, 2
        %v575 = vadd.f32 %v573, %v574
        %v576 = vrot.slane %v575, 1
        %v577 = vadd.f32 %v575, %v576
        %v578 = vrot.slane %v360, 4
        %v579 = vadd.f32 %v360, %v578
        %v580 = vrot.slane %v579, 2
        %v581 = vadd.f32 %v579, %v580
        %v582 = vrot.slane %v581, 1
        %v583 = vadd.f32 %v581, %v582
        %v584 = vrot.slane %v361, 4
        %v585 = vadd.f32 %v361, %v584
        %v586 = vrot.slane %v585, 2
        %v587 = vadd.f32 %v585, %v586
        %v588 = vrot.slane %v587, 1
        %v589 = vadd.f32 %v587, %v588
        %v590 = vrcp.pop 8.0
        %v591 = vmul.f32 %v571, %v590
        %v592 = vmul.f32 %v577, %v590
        %v593 = vmul.f32 %v583, %v590
        %v594 = vmul.f32 %v589, %v590
        %595 = vmatprep.subr.mxu0 0.0
        %596 = vmatpush1.msra.mxu0 %v377
        %597 = vmatprep.subr.mxu0 0.0
        %598 = vmatpush1.msra.mxu0 %v376
        %599 = vmatprep.subr.mxu0 0.0
        %600 = vmatpush1.msra.mxu0 %v375
        %601 = vmatprep.subr.mxu0 0.0
        %602 = vmatpush1.msra.mxu0 %v374
        %603 = vmatprep.subr.mxu0 0.0
        %604 = vmatpush1.msra.mxu0 %v373
        %605 = vmatprep.subr.mxu0 0.0
        %606 = vmatpush1.msra.mxu0 %v372
        %607 = vmatprep.subr.mxu0 0.0
        %608 = vmatpush1.msra.mxu0 %v371
        %609 = vmatprep.subr.mxu0 0.0
        %610 = vmatpush1.msra.mxu0 %v370
        %611 = vmatprep.subr.mxu0 0.0
        %612 = vmatpush1.msra.mxu0 %v369
        %613 = vmatprep.subr.mxu0 0.0
        %614 = vmatpush1.msra.mxu0 %v368
        %615 = vmatprep.subr.mxu0 0.0
        %616 = vmatpush1.msra.mxu0 %v367
        %617 = vmatprep.subr.mxu0 0.0
        %618 = vmatpush1.msra.mxu0 %v366
        %619 = vmatprep.subr.mxu0 0.0
        %620 = vmatpush1.msra.mxu0 %v365
        %621 = vmatprep.subr.mxu0 0.0
        %622 = vmatpush1.msra.mxu0 %v364
        %623 = vmatprep.subr.mxu0 0.0
        %624 = vmatpush1.msra.mxu0 %v363
        %625 = vmatprep.subr.mxu0 0.0
        %626 = vmatpush1.msra.mxu0 %v362
        %627 = vmatprep.subr.mxu0 0.0
        %628 = vmatpush2.msra.mxu0 %v393
        %629 = vmatprep.subr.mxu0 0.0
        %630 = vmatpush2.msra.mxu0 %v392
        %631 = vmatprep.subr.mxu0 0.0
        %632 = vmatpush2.msra.mxu0 %v391
        %633 = vmatprep.subr.mxu0 0.0
        %634 = vmatpush2.msra.mxu0 %v390
        %635 = vmatprep.subr.mxu0 0.0
        %636 = vmatpush2.msra.mxu0 %v389
        %637 = vmatprep.subr.mxu0 0.0
        %638 = vmatpush2.msra.mxu0 %v388
        %639 = vmatprep.subr.mxu0 0.0
        %640 = vmatpush2.msra.mxu0 %v387
        %641 = vmatprep.subr.mxu0 0.0
        %642 = vmatpush2.msra.mxu0 %v386
        %643 = vmatprep.subr.mxu0 0.0
        %644 = vmatpush2.msra.mxu0 %v385
        %645 = vmatprep.subr.mxu0 0.0
        %646 = vmatpush2.msra.mxu0 %v384
        %647 = vmatprep.subr.mxu0 0.0
        %648 = vmatpush2.msra.mxu0 %v383
        %649 = vmatprep.subr.mxu0 0.0
        %650 = vmatpush2.msra.mxu0 %v382
        %651 = vmatprep.subr.mxu0 0.0
        %652 = vmatpush2.msra.mxu0 %v381
        %653 = vmatprep.subr.mxu0 0.0
        %654 = vmatpush2.msra.mxu0 %v380
        %655 = vmatprep.subr.mxu0 0.0
        %656 = vmatpush2.msra.mxu0 %v379
        %657 = vmatprep.subr.mxu0 0.0
        %658 = vmatpush2.msra.mxu0 %v378
        %659 = vmatprep.mubr.f32.mxu0 %v592
        %660 = vmatmul.mubr.f32.gmra.mxu0 %v591
        %v661 = vpop.f32.mrf.mxu0
        %v662 = vadd.f32 0.0, %v661
        %v663 = vpop.f32.mrf.mxu0
        %664 = vdwg.mxu0
        %665 = vmatprep.subr.mxu0 0.0
        %666 = vmatpush1.msra.mxu0 %v409
        %667 = vmatprep.subr.mxu0 0.0
        %668 = vmatpush1.msra.mxu0 %v408
        %669 = vmatprep.subr.mxu0 0.0
        %670 = vmatpush1.msra.mxu0 %v407
        %671 = vmatprep.subr.mxu0 0.0
        %672 = vmatpush1.msra.mxu0 %v406
        %673 = vmatprep.subr.mxu0 0.0
        %674 = vmatpush1.msra.mxu0 %v405
        %675 = vmatprep.subr.mxu0 0.0
        %676 = vmatpush1.msra.mxu0 %v404
        %677 = vmatprep.subr.mxu0 0.0
        %678 = vmatpush1.msra.mxu0 %v403
        %679 = vmatprep.subr.mxu0 0.0
        %680 = vmatpush1.msra.mxu0 %v402
        %681 = vmatprep.subr.mxu0 0.0
        %682 = vmatpush1.msra.mxu0 %v401
        %683 = vmatprep.subr.mxu0 0.0
        %684 = vmatpush1.msra.mxu0 %v400
        %685 = vmatprep.subr.mxu0 0.0
        %686 = vmatpush1.msra.mxu0 %v399
        %687 = vmatprep.subr.mxu0 0.0
        %688 = vmatpush1.msra.mxu0 %v398
        %689 = vmatprep.subr.mxu0 0.0
        %690 = vmatpush1.msra.mxu0 %v397
        %691 = vmatprep.subr.mxu0 0.0
        %692 = vmatpush1.msra.mxu0 %v396
        %693 = vmatprep.subr.mxu0 0.0
        %694 = vmatpush1.msra.mxu0 %v395
        %695 = vmatprep.subr.mxu0 0.0
        %696 = vmatpush1.msra.mxu0 %v394
        %697 = vmatprep.subr.mxu0 0.0
        %698 = vmatpush2.msra.mxu0 %v425
        %699 = vmatprep.subr.mxu0 0.0
        %700 = vmatpush2.msra.mxu0 %v424
        %701 = vmatprep.subr.mxu0 0.0
        %702 = vmatpush2.msra.mxu0 %v423
        %703 = vmatprep.subr.mxu0 0.0
        %704 = vmatpush2.msra.mxu0 %v422
        %705 = vmatprep.subr.mxu0 0.0
        %706 = vmatpush2.msra.mxu0 %v421
        %707 = vmatprep.subr.mxu0 0.0
        %708 = vmatpush2.msra.mxu0 %v420
        %709 = vmatprep.subr.mxu0 0.0
        %710 = vmatpush2.msra.mxu0 %v419
        %711 = vmatprep.subr.mxu0 0.0
        %712 = vmatpush2.msra.mxu0 %v418
        %713 = vmatprep.subr.mxu0 0.0
        %714 = vmatpush2.msra.mxu0 %v417
        %715 = vmatprep.subr.mxu0 0.0
        %716 = vmatpush2.msra.mxu0 %v416
        %717 = vmatprep.subr.mxu0 0.0
        %718 = vmatpush2.msra.mxu0 %v415
        %719 = vmatprep.subr.mxu0 0.0
        %720 = vmatpush2.msra.mxu0 %v414
        %721 = vmatprep.subr.mxu0 0.0
        %722 = vmatpush2.msra.mxu0 %v413
        %723 = vmatprep.subr.mxu0 0.0
        %724 = vmatpush2.msra.mxu0 %v412
        %725 = vmatprep.subr.mxu0 0.0
        %726 = vmatpush2.msra.mxu0 %v411
        %727 = vmatprep.subr.mxu0 0.0
        %728 = vmatpush2.msra.mxu0 %v410
        %729 = vmatprep.mubr.f32.mxu0 %v594
        %730 = vmatmul.mubr.f32.gmra.mxu0 %v593
        %v731 = vpop.f32.mrf.mxu0
        %v732 = vadd.f32 %v662, %v731
        %v733 = vpop.f32.mrf.mxu0
        %734 = vdwg.mxu0
        %v735 = vld [vmem:[%s2] sm:$0xff]
        %v736 = vld [vmem:[%s2 + $0x8] sm:$0xff]
        %v737 = vld [vmem:[%s2 + $0x10] sm:$0xff]
        %v738 = vld [vmem:[%s2 + $0x18] sm:$0xff]
        %v739 = vld [vmem:[%s2 + $0x20] sm:$0xff]
        %v740 = vld [vmem:[%s2 + $0x28] sm:$0xff]
        %v741 = vld [vmem:[%s2 + $0x30] sm:$0xff]
        %v742 = vld [vmem:[%s2 + $0x38] sm:$0xff]
        %vm743 = vcmask 523264
        %v745 = vsel %vm743, %v563, 0
        %747 = vmatprep.subr.mxu0 0.0
        %748 = vmatpush1.msra.mxu0 0.0
        %749 = vmatprep.subr.mxu0 0.0
        %750 = vmatpush1.msra.mxu0 0.0
        %751 = vmatprep.subr.mxu0 0.0
        %752 = vmatpush1.msra.mxu0 0.0
        %753 = vmatprep.subr.mxu0 0.0
        %754 = vmatpush1.msra.mxu0 0.0
        %755 = vmatprep.subr.mxu0 0.0
        %756 = vmatpush1.msra.mxu0 0.0
        %757 = vmatprep.subr.mxu0 0.0
        %758 = vmatpush1.msra.mxu0 0.0
        %759 = vmatprep.subr.mxu0 0.0
        %760 = vmatpush1.msra.mxu0 0.0
        %761 = vmatprep.subr.mxu0 0.0
        %762 = vmatpush1.msra.mxu0 0.0
        %763 = vmatprep.subr.mxu0 0.0
        %764 = vmatpush1.msra.mxu0 %v742
        %765 = vmatprep.subr.mxu0 0.0
        %766 = vmatpush1.msra.mxu0 %v741
        %767 = vmatprep.subr.mxu0 0.0
        %768 = vmatpush1.msra.mxu0 %v740
        %769 = vmatprep.subr.mxu0 0.0
        %770 = vmatpush1.msra.mxu0 %v739
        %771 = vmatprep.subr.mxu0 0.0
        %772 = vmatpush1.msra.mxu0 %v738
        %773 = vmatprep.subr.mxu0 0.0
        %774 = vmatpush1.msra.mxu0 %v737
        %775 = vmatprep.subr.mxu0 0.0
        %776 = vmatpush1.msra.mxu0 %v736
        %777 = vmatprep.subr.mxu0 0.0
        %778 = vmatpush1.msra.mxu0 %v735
        %779 = vmatprep.subr.mxu0 0.0
        %780 = vmatpush2.msra.mxu0 0.0
        %781 = vmatprep.subr.mxu0 0.0
        %782 = vmatpush2.msra.mxu0 0.0
        %783 = vmatprep.subr.mxu0 0.0
        %784 = vmatpush2.msra.mxu0 0.0
        %785 = vmatprep.subr.mxu0 0.0
        %786 = vmatpush2.msra.mxu0 0.0
        %787 = vmatprep.subr.mxu0 0.0
        %788 = vmatpush2.msra.mxu0 0.0
        %789 = vmatprep.subr.mxu0 0.0
        %790 = vmatpush2.msra.mxu0 0.0
        %791 = vmatprep.subr.mxu0 0.0
        %792 = vmatpush2.msra.mxu0 0.0
        %793 = vmatprep.subr.mxu0 0.0
        %794 = vmatpush2.msra.mxu0 0.0
        %795 = vmatprep.subr.mxu0 0.0
        %796 = vmatpush2.msra.mxu0 0.0
        %797 = vmatprep.subr.mxu0 0.0
        %798 = vmatpush2.msra.mxu0 0.0
        %799 = vmatprep.subr.mxu0 0.0
        %800 = vmatpush2.msra.mxu0 0.0
        %801 = vmatprep.subr.mxu0 0.0
        %802 = vmatpush2.msra.mxu0 0.0
        %803 = vmatprep.subr.mxu0 0.0
        %804 = vmatpush2.msra.mxu0 0.0
        %805 = vmatprep.subr.mxu0 0.0
        %806 = vmatpush2.msra.mxu0 0.0
        %807 = vmatprep.subr.mxu0 0.0
        %808 = vmatpush2.msra.mxu0 0.0
        %809 = vmatprep.subr.mxu0 0.0
        %810 = vmatpush2.msra.mxu0 0.0
        %811 = vmatprep.mubr.f32.mxu0 0.0
        %812 = vmatmul.mubr.f32.gmra.mxu0 %v745
        %v813 = vpop.f32.mrf.mxu0
        %v814 = vadd.f32 0.0, %v813
        %v815 = vpop.f32.mrf.mxu0
        %816 = vdwg.mxu0
        %v817 = vmax.f32 %v814, 0.0
        %v818 = vld [vmem:[%s3] sm:$0xff]
        %v819 = vld [vmem:[%s3 + $0x8] sm:$0xff]
        %v822 = vcombine.high %v818, %v818
        %v823 = vcombine.high %v819, %v819
        %vm824 = vcmask 31744
        %v826 = vsel %vm824, %v817, 0
        %vm828 = vcmask 1043456
        %v829 = vsel %vm828, %v818, 0
        %v831 = vsel %vm828, %v822, 0
        %v833 = vsel %vm828, %v819, 0
        %v835 = vsel %vm828, %v823, 0
        %837 = vmatprep.subr.mxu0 0.0
        %838 = vmatpush1.msra.mxu0 0.0
        %839 = vmatprep.subr.mxu0 0.0
        %840 = vmatpush1.msra.mxu0 0.0
        %841 = vmatprep.subr.mxu0 0.0
        %842 = vmatpush1.msra.mxu0 0.0
        %843 = vmatprep.subr.mxu0 0.0
        %844 = vmatpush1.msra.mxu0 0.0
        %845 = vmatprep.subr.mxu0 0.0
        %846 = vmatpush1.msra.mxu0 0.0
        %847 = vmatprep.subr.mxu0 0.0
        %848 = vmatpush1.msra.mxu0 0.0
        %849 = vmatprep.subr.mxu0 0.0
        %850 = vmatpush1.msra.mxu0 0.0
        %851 = vmatprep.subr.mxu0 0.0
        %852 = vmatpush1.msra.mxu0 0.0
        %853 = vmatprep.subr.mxu0 0.0
        %854 = vmatpush1.msra.mxu0 0.0
        %855 = vmatprep.subr.mxu0 0.0
        %856 = vmatpush1.msra.mxu0 0.0
        %857 = vmatprep.subr.mxu0 0.0
        %858 = vmatpush1.msra.mxu0 0.0
        %859 = vmatprep.subr.mxu0 0.0
        %860 = vmatpush1.msra.mxu0 0.0
        %861 = vmatprep.subr.mxu0 0.0
        %862 = vmatpush1.msra.mxu0 0.0
        %863 = vmatprep.subr.mxu0 0.0
        %864 = vmatpush1.msra.mxu0 0.0
        %865 = vmatprep.subr.mxu0 0.0
        %866 = vmatpush1.msra.mxu0 0.0
        %867 = vmatprep.subr.mxu0 %v831
        %868 = vmatpush1.msra.mxu0 %v829
        %869 = vmatprep.subr.mxu0 0.0
        %870 = vmatpush2.msra.mxu0 0.0
        %871 = vmatprep.subr.mxu0 0.0
        %872 = vmatpush2.msra.mxu0 0.0
        %873 = vmatprep.subr.mxu0 0.0
        %874 = vmatpush2.msra.mxu0 0.0
        %875 = vmatprep.subr.mxu0 0.0
        %876 = vmatpush2.msra.mxu0 0.0
        %877 = vmatprep.subr.mxu0 0.0
        %878 = vmatpush2.msra.mxu0 0.0
        %879 = vmatprep.subr.mxu0 0.0
        %880 = vmatpush2.msra.mxu0 0.0
        %881 = vmatprep.subr.mxu0 0.0
        %882 = vmatpush2.msra.mxu0 0.0
        %883 = vmatprep.subr.mxu0 0.0
        %884 = vmatpush2.msra.mxu0 0.0
        %885 = vmatprep.subr.mxu0 0.0
        %886 = vmatpush2.msra.mxu0 0.0
        %887 = vmatprep.subr.mxu0 0.0
        %888 = vmatpush2.msra.mxu0 0.0
        %889 = vmatprep.subr.mxu0 0.0
        %890 = vmatpush2.msra.mxu0 0.0
        %891 = vmatprep.subr.mxu0 0.0
        %892 = vmatpush2.msra.mxu0 0.0
        %893 = vmatprep.subr.mxu0 0.0
        %894 = vmatpush2.msra.mxu0 0.0
        %895 = vmatprep.subr.mxu0 0.0
        %896 = vmatpush2.msra.mxu0 0.0
        %897 = vmatprep.subr.mxu0 0.0
        %898 = vmatpush2.msra.mxu0 0.0
        %899 = vmatprep.subr.mxu0 0.0
        %900 = vmatpush2.msra.mxu0 0.0
        %901 = vmatprep.mubr.f32.mxu0 0.0
        %902 = vmatmul.mubr.f32.gmra.mxu0 %v826
        %v903 = vpop.f32.mrf.mxu0
        %v904 = vadd.f32 0.0, %v903
        %v905 = vpop.f32.mrf.mxu0
        %v906 = vadd.f32 0.0, %v905
        %907 = vdwg.mxu0
        %908 = vmatprep.subr.mxu0 0.0
        %909 = vmatpush1.msra.mxu0 0.0
        %910 = vmatprep.subr.mxu0 0.0
        %911 = vmatpush1.msra.mxu0 0.0
        %912 = vmatprep.subr.mxu0 0.0
        %913 = vmatpush1.msra.mxu0 0.0
        %914 = vmatprep.subr.mxu0 0.0
        %915 = vmatpush1.msra.mxu0 0.0
        %916 = vmatprep.subr.mxu0 0.0
        %917 = vmatpush1.msra.mxu0 0.0
        %918 = vmatprep.subr.mxu0 0.0
        %919 = vmatpush1.msra.mxu0 0.0
        %920 = vmatprep.subr.mxu0 0.0
        %921 = vmatpush1.msra.mxu0 0.0
        %922 = vmatprep.subr.mxu0 0.0
        %923 = vmatpush1.msra.mxu0 0.0
        %924 = vmatprep.subr.mxu0 0.0
        %925 = vmatpush1.msra.mxu0 0.0
        %926 = vmatprep.subr.mxu0 0.0
        %927 = vmatpush1.msra.mxu0 0.0
        %928 = vmatprep.subr.mxu0 0.0
        %929 = vmatpush1.msra.mxu0 0.0
        %930 = vmatprep.subr.mxu0 0.0
        %931 = vmatpush1.msra.mxu0 0.0
        %932 = vmatprep.subr.mxu0 0.0
        %933 = vmatpush1.msra.mxu0 0.0
        %934 = vmatprep.subr.mxu0 0.0
        %935 = vmatpush1.msra.mxu0 0.0
        %936 = vmatprep.subr.mxu0 0.0
        %937 = vmatpush1.msra.mxu0 0.0
        %938 = vmatprep.subr.mxu0 %v835
        %939 = vmatpush1.msra.mxu0 %v833
        %940 = vmatprep.subr.mxu0 0.0
        %941 = vmatpush2.msra.mxu0 0.0
        %942 = vmatprep.subr.mxu0 0.0
        %943 = vmatpush2.msra.mxu0 0.0
        %944 = vmatprep.subr.mxu0 0.0
        %945 = vmatpush2.msra.mxu0 0.0
        %946 = vmatprep.subr.mxu0 0.0
        %947 = vmatpush2.msra.mxu0 0.0
        %948 = vmatprep.subr.mxu0 0.0
        %949 = vmatpush2.msra.mxu0 0.0
        %950 = vmatprep.subr.mxu0 0.0
        %951 = vmatpush2.msra.mxu0 0.0
        %952 = vmatprep.subr.mxu0 0.0
        %953 = vmatpush2.msra.mxu0 0.0
        %954 = vmatprep.subr.mxu0 0.0
        %955 = vmatpush2.msra.mxu0 0.0
        %956 = vmatprep.subr.mxu0 0.0
        %957 = vmatpush2.msra.mxu0 0.0
        %958 = vmatprep.subr.mxu0 0.0
        %959 = vmatpush2.msra.mxu0 0.0
        %960 = vmatprep.subr.mxu0 0.0
        %961 = vmatpush2.msra.mxu0 0.0
        %962 = vmatprep.subr.mxu0 0.0
        %963 = vmatpush2.msra.mxu0 0.0
        %964 = vmatprep.subr.mxu0 0.0
        %965 = vmatpush2.msra.mxu0 0.0
        %966 = vmatprep.subr.mxu0 0.0
        %967 = vmatpush2.msra.mxu0 0.0
        %968 = vmatprep.subr.mxu0 0.0
        %969 = vmatpush2.msra.mxu0 0.0
        %970 = vmatprep.subr.mxu0 0.0
        %971 = vmatpush2.msra.mxu0 0.0
        %972 = vmatprep.mubr.f32.mxu0 0.0
        %973 = vmatmul.mubr.f32.gmra.mxu0 %v826
        %v974 = vpop.f32.mrf.mxu0
        %v975 = vadd.f32 0.0, %v974
        %v976 = vpop.f32.mrf.mxu0
        %v977 = vadd.f32 0.0, %v976
        %978 = vdwg.mxu0
        %v979 = vxor.u32 %v904, 2147483648
        %v980 = vxor.u32 %v906, 2147483648
        %v981 = vxor.u32 %v975, 2147483648
        %v982 = vxor.u32 %v977, 2147483648
        %v983 = vmul.f32 %v979, 1.442695
        %v984 = vpow.pop %v983
        %v985 = vmul.f32 %v980, 1.442695
        %v986 = vpow.pop %v985
        %v987 = vmul.f32 %v981, 1.442695
        %v988 = vpow.pop %v987
        %v989 = vmul.f32 %v982, 1.442695
        %v990 = vpow.pop %v989
        %v991 = vadd.f32 %v984, 1.0
        %v992 = vadd.f32 %v986, 1.0
        %v993 = vadd.f32 %v988, 1.0
        %v994 = vadd.f32 %v990, 1.0
        %v995 = vrcp.pop %v991
        %v996 = vmul.f32 1.0, %v995
        %v997 = vrcp.pop %v992
        %v998 = vmul.f32 1.0, %v997
        %v999 = vrcp.pop %v993
        %v1000 = vmul.f32 1.0, %v999
        %v1001 = vrcp.pop %v994
        %v1002 = vmul.f32 1.0, %v1001
        %v1003 = vld [vmem:[%s6] sm:$0xff]
        %v1004 = vld [vmem:[%s6 + $0x8] sm:$0xff]
        %v1005 = vld [vmem:[%s6 + $0x10] sm:$0xff]
        %v1006 = vld [vmem:[%s6 + $0x18] sm:$0xff]
        %v1007 = vld [vmem:[%s6 + $0x20] sm:$0xff]
        %v1008 = vld [vmem:[%s6 + $0x28] sm:$0xff]
        %v1009 = vld [vmem:[%s6 + $0x30] sm:$0xff]
        %v1010 = vld [vmem:[%s6 + $0x38] sm:$0xff]
        %v1011 = vld [vmem:[%s6 + $0x40] sm:$0xff]
        %v1012 = vld [vmem:[%s6 + $0x48] sm:$0xff]
        %v1013 = vld [vmem:[%s6 + $0x50] sm:$0xff]
        %v1014 = vld [vmem:[%s6 + $0x58] sm:$0xff]
        %v1015 = vld [vmem:[%s6 + $0x60] sm:$0xff]
        %v1016 = vld [vmem:[%s6 + $0x68] sm:$0xff]
        %v1017 = vld [vmem:[%s6 + $0x70] sm:$0xff]
        %v1018 = vld [vmem:[%s6 + $0x78] sm:$0xff]
        %v1019 = vld [vmem:[%s6 + $0x80] sm:$0xff]
        %v1020 = vld [vmem:[%s6 + $0x88] sm:$0xff]
        %v1021 = vld [vmem:[%s6 + $0x90] sm:$0xff]
        %v1022 = vld [vmem:[%s6 + $0x98] sm:$0xff]
        %v1023 = vld [vmem:[%s6 + $0xa0] sm:$0xff]
        %v1024 = vld [vmem:[%s6 + $0xa8] sm:$0xff]
        %v1025 = vld [vmem:[%s6 + $0xb0] sm:$0xff]
        %v1026 = vld [vmem:[%s6 + $0xb8] sm:$0xff]
        %v1027 = vld [vmem:[%s6 + $0xc0] sm:$0xff]
        %v1028 = vld [vmem:[%s6 + $0xc8] sm:$0xff]
        %v1029 = vld [vmem:[%s6 + $0xd0] sm:$0xff]
        %v1030 = vld [vmem:[%s6 + $0xd8] sm:$0xff]
        %v1031 = vld [vmem:[%s6 + $0xe0] sm:$0xff]
        %v1032 = vld [vmem:[%s6 + $0xe8] sm:$0xff]
        %v1033 = vld [vmem:[%s6 + $0xf0] sm:$0xff]
        %v1034 = vld [vmem:[%s6 + $0xf8] sm:$0xff]
        %v1035 = vld [vmem:[%s6 + $0x100] sm:$0xff]
        %v1036 = vld [vmem:[%s6 + $0x108] sm:$0xff]
        %v1037 = vld [vmem:[%s6 + $0x110] sm:$0xff]
        %v1038 = vld [vmem:[%s6 + $0x118] sm:$0xff]
        %v1039 = vld [vmem:[%s6 + $0x120] sm:$0xff]
        %v1040 = vld [vmem:[%s6 + $0x128] sm:$0xff]
        %v1041 = vld [vmem:[%s6 + $0x130] sm:$0xff]
        %v1042 = vld [vmem:[%s6 + $0x138] sm:$0xff]
        %v1043 = vld [vmem:[%s6 + $0x140] sm:$0xff]
        %v1044 = vld [vmem:[%s6 + $0x148] sm:$0xff]
        %v1045 = vld [vmem:[%s6 + $0x150] sm:$0xff]
        %v1046 = vld [vmem:[%s6 + $0x158] sm:$0xff]
        %v1047 = vld [vmem:[%s6 + $0x160] sm:$0xff]
        %v1048 = vld [vmem:[%s6 + $0x168] sm:$0xff]
        %v1049 = vld [vmem:[%s6 + $0x170] sm:$0xff]
        %v1050 = vld [vmem:[%s6 + $0x178] sm:$0xff]
        %v1051 = vld [vmem:[%s6 + $0x180] sm:$0xff]
        %v1052 = vld [vmem:[%s6 + $0x188] sm:$0xff]
        %v1053 = vld [vmem:[%s6 + $0x190] sm:$0xff]
        %v1054 = vld [vmem:[%s6 + $0x198] sm:$0xff]
        %v1055 = vld [vmem:[%s6 + $0x1a0] sm:$0xff]
        %v1056 = vld [vmem:[%s6 + $0x1a8] sm:$0xff]
        %v1057 = vld [vmem:[%s6 + $0x1b0] sm:$0xff]
        %v1058 = vld [vmem:[%s6 + $0x1b8] sm:$0xff]
        %v1059 = vld [vmem:[%s6 + $0x1c0] sm:$0xff]
        %v1060 = vld [vmem:[%s6 + $0x1c8] sm:$0xff]
        %v1061 = vld [vmem:[%s6 + $0x1d0] sm:$0xff]
        %v1062 = vld [vmem:[%s6 + $0x1d8] sm:$0xff]
        %v1063 = vld [vmem:[%s6 + $0x1e0] sm:$0xff]
        %v1064 = vld [vmem:[%s6 + $0x1e8] sm:$0xff]
        %v1065 = vld [vmem:[%s6 + $0x1f0] sm:$0xff]
        %v1066 = vld [vmem:[%s6 + $0x1f8] sm:$0xff]
        %1067 = vmatprep.subr.mxu0 0.0
        %1068 = vmatpush1.msra.mxu0 %v1018
        %1069 = vmatprep.subr.mxu0 0.0
        %1070 = vmatpush1.msra.mxu0 %v1017
        %1071 = vmatprep.subr.mxu0 0.0
        %1072 = vmatpush1.msra.mxu0 %v1016
        %1073 = vmatprep.subr.mxu0 0.0
        %1074 = vmatpush1.msra.mxu0 %v1015
        %1075 = vmatprep.subr.mxu0 0.0
        %1076 = vmatpush1.msra.mxu0 %v1014
        %1077 = vmatprep.subr.mxu0 0.0
        %1078 = vmatpush1.msra.mxu0 %v1013
        %1079 = vmatprep.subr.mxu0 0.0
        %1080 = vmatpush1.msra.mxu0 %v1012
        %1081 = vmatprep.subr.mxu0 0.0
        %1082 = vmatpush1.msra.mxu0 %v1011
        %1083 = vmatprep.subr.mxu0 0.0
        %1084 = vmatpush1.msra.mxu0 %v1010
        %1085 = vmatprep.subr.mxu0 0.0
        %1086 = vmatpush1.msra.mxu0 %v1009
        %1087 = vmatprep.subr.mxu0 0.0
        %1088 = vmatpush1.msra.mxu0 %v1008
        %1089 = vmatprep.subr.mxu0 0.0
        %1090 = vmatpush1.msra.mxu0 %v1007
        %1091 = vmatprep.subr.mxu0 0.0
        %1092 = vmatpush1.msra.mxu0 %v1006
        %1093 = vmatprep.subr.mxu0 0.0
        %1094 = vmatpush1.msra.mxu0 %v1005
        %1095 = vmatprep.subr.mxu0 0.0
        %1096 = vmatpush1.msra.mxu0 %v1004
        %1097 = vmatprep.subr.mxu0 0.0
        %1098 = vmatpush1.msra.mxu0 %v1003
        %1099 = vmatprep.subr.mxu0 0.0
        %1100 = vmatpush2.msra.mxu0 %v1034
        %1101 = vmatprep.subr.mxu0 0.0
        %1102 = vmatpush2.msra.mxu0 %v1033
        %1103 = vmatprep.subr.mxu0 0.0
        %1104 = vmatpush2.msra.mxu0 %v1032
        %1105 = vmatprep.subr.mxu0 0.0
        %1106 = vmatpush2.msra.mxu0 %v1031
        %1107 = vmatprep.subr.mxu0 0.0
        %1108 = vmatpush2.msra.mxu0 %v1030
        %1109 = vmatprep.subr.mxu0 0.0
        %1110 = vmatpush2.msra.mxu0 %v1029
        %1111 = vmatprep.subr.mxu0 0.0
        %1112 = vmatpush2.msra.mxu0 %v1028
        %1113 = vmatprep.subr.mxu0 0.0
        %1114 = vmatpush2.msra.mxu0 %v1027
        %1115 = vmatprep.subr.mxu0 0.0
        %1116 = vmatpush2.msra.mxu0 %v1026
        %1117 = vmatprep.subr.mxu0 0.0
        %1118 = vmatpush2.msra.mxu0 %v1025
        %1119 = vmatprep.subr.mxu0 0.0
        %1120 = vmatpush2.msra.mxu0 %v1024
        %1121 = vmatprep.subr.mxu0 0.0
        %1122 = vmatpush2.msra.mxu0 %v1023
        %1123 = vmatprep.subr.mxu0 0.0
        %1124 = vmatpush2.msra.mxu0 %v1022
        %1125 = vmatprep.subr.mxu0 0.0
        %1126 = vmatpush2.msra.mxu0 %v1021
        %1127 = vmatprep.subr.mxu0 0.0
        %1128 = vmatpush2.msra.mxu0 %v1020
        %1129 = vmatprep.subr.mxu0 0.0
        %1130 = vmatpush2.msra.mxu0 %v1019
        %1131 = vmatprep.mubr.f32.mxu0 %v592
        %1132 = vmatmul.mubr.f32.gmra.mxu0 %v591
        %v1133 = vpop.f32.mrf.mxu0
        %v1134 = vadd.f32 0.0, %v1133
        %v1135 = vpop.f32.mrf.mxu0
        %1136 = vdwg.mxu0
        %1137 = vmatprep.subr.mxu0 0.0
        %1138 = vmatpush1.msra.mxu0 %v1050
        %1139 = vmatprep.subr.mxu0 0.0
        %1140 = vmatpush1.msra.mxu0 %v1049
        %1141 = vmatprep.subr.mxu0 0.0
        %1142 = vmatpush1.msra.mxu0 %v1048
        %1143 = vmatprep.subr.mxu0 0.0
        %1144 = vmatpush1.msra.mxu0 %v1047
        %1145 = vmatprep.subr.mxu0 0.0
        %1146 = vmatpush1.msra.mxu0 %v1046
        %1147 = vmatprep.subr.mxu0 0.0
        %1148 = vmatpush1.msra.mxu0 %v1045
        %1149 = vmatprep.subr.mxu0 0.0
        %1150 = vmatpush1.msra.mxu0 %v1044
        %1151 = vmatprep.subr.mxu0 0.0
        %1152 = vmatpush1.msra.mxu0 %v1043
        %1153 = vmatprep.subr.mxu0 0.0
        %1154 = vmatpush1.msra.mxu0 %v1042
        %1155 = vmatprep.subr.mxu0 0.0
        %1156 = vmatpush1.msra.mxu0 %v1041
        %1157 = vmatprep.subr.mxu0 0.0
        %1158 = vmatpush1.msra.mxu0 %v1040
        %1159 = vmatprep.subr.mxu0 0.0
        %1160 = vmatpush1.msra.mxu0 %v1039
        %1161 = vmatprep.subr.mxu0 0.0
        %1162 = vmatpush1.msra.mxu0 %v1038
        %1163 = vmatprep.subr.mxu0 0.0
        %1164 = vmatpush1.msra.mxu0 %v1037
        %1165 = vmatprep.subr.mxu0 0.0
        %1166 = vmatpush1.msra.mxu0 %v1036
        %1167 = vmatprep.subr.mxu0 0.0
        %1168 = vmatpush1.msra.mxu0 %v1035
        %1169 = vmatprep.subr.mxu0 0.0
        %1170 = vmatpush2.msra.mxu0 %v1066
        %1171 = vmatprep.subr.mxu0 0.0
        %1172 = vmatpush2.msra.mxu0 %v1065
        %1173 = vmatprep.subr.mxu0 0.0
        %1174 = vmatpush2.msra.mxu0 %v1064
        %1175 = vmatprep.subr.mxu0 0.0
        %1176 = vmatpush2.msra.mxu0 %v1063
        %1177 = vmatprep.subr.mxu0 0.0
        %1178 = vmatpush2.msra.mxu0 %v1062
        %1179 = vmatprep.subr.mxu0 0.0
        %1180 = vmatpush2.msra.mxu0 %v1061
        %1181 = vmatprep.subr.mxu0 0.0
        %1182 = vmatpush2.msra.mxu0 %v1060
        %1183 = vmatprep.subr.mxu0 0.0
        %1184 = vmatpush2.msra.mxu0 %v1059
        %1185 = vmatprep.subr.mxu0 0.0
        %1186 = vmatpush2.msra.mxu0 %v1058
        %1187 = vmatprep.subr.mxu0 0.0
        %1188 = vmatpush2.msra.mxu0 %v1057
        %1189 = vmatprep.subr.mxu0 0.0
        %1190 = vmatpush2.msra.mxu0 %v1056
        %1191 = vmatprep.subr.mxu0 0.0
        %1192 = vmatpush2.msra.mxu0 %v1055
        %1193 = vmatprep.subr.mxu0 0.0
        %1194 = vmatpush2.msra.mxu0 %v1054
        %1195 = vmatprep.subr.mxu0 0.0
        %1196 = vmatpush2.msra.mxu0 %v1053
        %1197 = vmatprep.subr.mxu0 0.0
        %1198 = vmatpush2.msra.mxu0 %v1052
        %1199 = vmatprep.subr.mxu0 0.0
        %1200 = vmatpush2.msra.mxu0 %v1051
        %1201 = vmatprep.mubr.f32.mxu0 %v594
        %1202 = vmatmul.mubr.f32.gmra.mxu0 %v593
        %v1203 = vpop.f32.mrf.mxu0
        %v1204 = vadd.f32 %v1134, %v1203
        %v1205 = vpop.f32.mrf.mxu0
        %1206 = vdwg.mxu0
        %v1207 = vmax.f32 %v1204, 0.0
        %v1208 = vld [vmem:[%s7] sm:$0xff]
        %v1209 = vld [vmem:[%s7 + $0x8] sm:$0xff]
        %v1210 = vld [vmem:[%s7 + $0x10] sm:$0xff]
        %v1211 = vld [vmem:[%s7 + $0x18] sm:$0xff]
        %v1212 = vld [vmem:[%s7 + $0x20] sm:$0xff]
        %v1213 = vld [vmem:[%s7 + $0x28] sm:$0xff]
        %v1214 = vld [vmem:[%s7 + $0x30] sm:$0xff]
        %v1215 = vld [vmem:[%s7 + $0x38] sm:$0xff]
        %v1216 = vld [vmem:[%s7 + $0x40] sm:$0xff]
        %v1217 = vld [vmem:[%s7 + $0x48] sm:$0xff]
        %v1218 = vld [vmem:[%s7 + $0x50] sm:$0xff]
        %v1219 = vld [vmem:[%s7 + $0x58] sm:$0xff]
        %v1220 = vld [vmem:[%s7 + $0x60] sm:$0xff]
        %v1221 = vld [vmem:[%s7 + $0x68] sm:$0xff]
        %v1222 = vld [vmem:[%s7 + $0x70] sm:$0xff]
        %v1223 = vld [vmem:[%s7 + $0x78] sm:$0xff]
        %vm1224 = vcmask 261120
        %v1226 = vsel %vm1224, %v1207, 0
        %1228 = vmatprep.subr.mxu0 0.0
        %1229 = vmatpush1.msra.mxu0 0.0
        %1230 = vmatprep.subr.mxu0 0.0
        %1231 = vmatpush1.msra.mxu0 0.0
        %1232 = vmatprep.subr.mxu0 0.0
        %1233 = vmatpush1.msra.mxu0 0.0
        %1234 = vmatprep.subr.mxu0 0.0
        %1235 = vmatpush1.msra.mxu0 0.0
        %1236 = vmatprep.subr.mxu0 0.0
        %1237 = vmatpush1.msra.mxu0 0.0
        %1238 = vmatprep.subr.mxu0 0.0
        %1239 = vmatpush1.msra.mxu0 0.0
        %1240 = vmatprep.subr.mxu0 0.0
        %1241 = vmatpush1.msra.mxu0 0.0
        %1242 = vmatprep.subr.mxu0 0.0
        %1243 = vmatpush1.msra.mxu0 0.0
        %1244 = vmatprep.subr.mxu0 0.0
        %1245 = vmatpush1.msra.mxu0 0.0
        %1246 = vmatprep.subr.mxu0 0.0
        %1247 = vmatpush1.msra.mxu0 0.0
        %1248 = vmatprep.subr.mxu0 0.0
        %1249 = vmatpush1.msra.mxu0 0.0
        %1250 = vmatprep.subr.mxu0 0.0
        %1251 = vmatpush1.msra.mxu0 0.0
        %1252 = vmatprep.subr.mxu0 %v1221
        %1253 = vmatpush1.msra.mxu0 %v1220
        %1254 = vmatprep.subr.mxu0 %v1217
        %1255 = vmatpush1.msra.mxu0 %v1216
        %1256 = vmatprep.subr.mxu0 %v1213
        %1257 = vmatpush1.msra.mxu0 %v1212
        %1258 = vmatprep.subr.mxu0 %v1209
        %1259 = vmatpush1.msra.mxu0 %v1208
        %1260 = vmatprep.subr.mxu0 0.0
        %1261 = vmatpush2.msra.mxu0 0.0
        %1262 = vmatprep.subr.mxu0 0.0
        %1263 = vmatpush2.msra.mxu0 0.0
        %1264 = vmatprep.subr.mxu0 0.0
        %1265 = vmatpush2.msra.mxu0 0.0
        %1266 = vmatprep.subr.mxu0 0.0
        %1267 = vmatpush2.msra.mxu0 0.0
        %1268 = vmatprep.subr.mxu0 0.0
        %1269 = vmatpush2.msra.mxu0 0.0
        %1270 = vmatprep.subr.mxu0 0.0
        %1271 = vmatpush2.msra.mxu0 0.0
        %1272 = vmatprep.subr.mxu0 0.0
        %1273 = vmatpush2.msra.mxu0 0.0
        %1274 = vmatprep.subr.mxu0 0.0
        %1275 = vmatpush2.msra.mxu0 0.0
        %1276 = vmatprep.subr.mxu0 0.0
        %1277 = vmatpush2.msra.mxu0 0.0
        %1278 = vmatprep.subr.mxu0 0.0
        %1279 = vmatpush2.msra.mxu0 0.0
        %1280 = vmatprep.subr.mxu0 0.0
        %1281 = vmatpush2.msra.mxu0 0.0
        %1282 = vmatprep.subr.mxu0 0.0
        %1283 = vmatpush2.msra.mxu0 0.0
        %1284 = vmatprep.subr.mxu0 0.0
        %1285 = vmatpush2.msra.mxu0 0.0
        %1286 = vmatprep.subr.mxu0 0.0
        %1287 = vmatpush2.msra.mxu0 0.0
        %1288 = vmatprep.subr.mxu0 0.0
        %1289 = vmatpush2.msra.mxu0 0.0
        %1290 = vmatprep.subr.mxu0 0.0
        %1291 = vmatpush2.msra.mxu0 0.0
        %1292 = vmatprep.mubr.f32.mxu0 0.0
        %1293 = vmatmul.mubr.f32.gmra.mxu0 %v1226
        %v1294 = vpop.f32.mrf.mxu0
        %v1295 = vadd.f32 0.0, %v1294
        %v1296 = vpop.f32.mrf.mxu0
        %v1297 = vadd.f32 0.0, %v1296
        %1298 = vdwg.mxu0
        %1299 = vmatprep.subr.mxu0 0.0
        %1300 = vmatpush1.msra.mxu0 0.0
        %1301 = vmatprep.subr.mxu0 0.0
        %1302 = vmatpush1.msra.mxu0 0.0
        %1303 = vmatprep.subr.mxu0 0.0
        %1304 = vmatpush1.msra.mxu0 0.0
        %1305 = vmatprep.subr.mxu0 0.0
        %1306 = vmatpush1.msra.mxu0 0.0
        %1307 = vmatprep.subr.mxu0 0.0
        %1308 = vmatpush1.msra.mxu0 0.0
        %1309 = vmatprep.subr.mxu0 0.0
        %1310 = vmatpush1.msra.mxu0 0.0
        %1311 = vmatprep.subr.mxu0 0.0
        %1312 = vmatpush1.msra.mxu0 0.0
        %1313 = vmatprep.subr.mxu0 0.0
        %1314 = vmatpush1.msra.mxu0 0.0
        %1315 = vmatprep.subr.mxu0 0.0
        %1316 = vmatpush1.msra.mxu0 0.0
        %1317 = vmatprep.subr.mxu0 0.0
        %1318 = vmatpush1.msra.mxu0 0.0
        %1319 = vmatprep.subr.mxu0 0.0
        %1320 = vmatpush1.msra.mxu0 0.0
        %1321 = vmatprep.subr.mxu0 0.0
        %1322 = vmatpush1.msra.mxu0 0.0
        %1323 = vmatprep.subr.mxu0 %v1223
        %1324 = vmatpush1.msra.mxu0 %v1222
        %1325 = vmatprep.subr.mxu0 %v1219
        %1326 = vmatpush1.msra.mxu0 %v1218
        %1327 = vmatprep.subr.mxu0 %v1215
        %1328 = vmatpush1.msra.mxu0 %v1214
        %1329 = vmatprep.subr.mxu0 %v1211
        %1330 = vmatpush1.msra.mxu0 %v1210
        %1331 = vmatprep.subr.mxu0 0.0
        %1332 = vmatpush2.msra.mxu0 0.0
        %1333 = vmatprep.subr.mxu0 0.0
        %1334 = vmatpush2.msra.mxu0 0.0
        %1335 = vmatprep.subr.mxu0 0.0
        %1336 = vmatpush2.msra.mxu0 0.0
        %1337 = vmatprep.subr.mxu0 0.0
        %1338 = vmatpush2.msra.mxu0 0.0
        %1339 = vmatprep.subr.mxu0 0.0
        %1340 = vmatpush2.msra.mxu0 0.0
        %1341 = vmatprep.subr.mxu0 0.0
        %1342 = vmatpush2.msra.mxu0 0.0
        %1343 = vmatprep.subr.mxu0 0.0
        %1344 = vmatpush2.msra.mxu0 0.0
        %1345 = vmatprep.subr.mxu0 0.0
        %1346 = vmatpush2.msra.mxu0 0.0
        %1347 = vmatprep.subr.mxu0 0.0
        %1348 = vmatpush2.msra.mxu0 0.0
        %1349 = vmatprep.subr.mxu0 0.0
        %1350 = vmatpush2.msra.mxu0 0.0
        %1351 = vmatprep.subr.mxu0 0.0
        %1352 = vmatpush2.msra.mxu0 0.0
        %1353 = vmatprep.subr.mxu0 0.0
        %1354 = vmatpush2.msra.mxu0 0.0
        %1355 = vmatprep.subr.mxu0 0.0
        %1356 = vmatpush2.msra.mxu0 0.0
        %1357 = vmatprep.subr.mxu0 0.0
        %1358 = vmatpush2.msra.mxu0 0.0
        %1359 = vmatprep.subr.mxu0 0.0
        %1360 = vmatpush2.msra.mxu0 0.0
        %1361 = vmatprep.subr.mxu0 0.0
        %1362 = vmatpush2.msra.mxu0 0.0
        %1363 = vmatprep.mubr.f32.mxu0 0.0
        %1364 = vmatmul.mubr.f32.gmra.mxu0 %v1226
        %v1365 = vpop.f32.mrf.mxu0
        %v1366 = vadd.f32 0.0, %v1365
        %v1367 = vpop.f32.mrf.mxu0
        %v1368 = vadd.f32 0.0, %v1367
        %1369 = vdwg.mxu0
        %v1370 = vxor.u32 %v1295, 2147483648
        %v1371 = vxor.u32 %v1297, 2147483648
        %v1372 = vxor.u32 %v1366, 2147483648
        %v1373 = vxor.u32 %v1368, 2147483648
        %v1374 = vmul.f32 %v1370, 1.442695
        %v1375 = vpow.pop %v1374
        %v1376 = vmul.f32 %v1371, 1.442695
        %v1377 = vpow.pop %v1376
        %v1378 = vmul.f32 %v1372, 1.442695
        %v1379 = vpow.pop %v1378
        %v1380 = vmul.f32 %v1373, 1.442695
        %v1381 = vpow.pop %v1380
        %v1382 = vadd.f32 %v1375, 1.0
        %v1383 = vadd.f32 %v1377, 1.0
        %v1384 = vadd.f32 %v1379, 1.0
        %v1385 = vadd.f32 %v1381, 1.0
        %v1386 = vrcp.pop %v1382
        %v1387 = vmul.f32 1.0, %v1386
        %v1388 = vrcp.pop %v1383
        %v1389 = vmul.f32 1.0, %v1388
        %v1390 = vrcp.pop %v1384
        %v1391 = vmul.f32 1.0, %v1390
        %v1392 = vrcp.pop %v1385
        %v1393 = vmul.f32 1.0, %v1392
        %v1394 = vld [vmem:[%s4] sm:$0xff]
        %v1395 = vld [vmem:[%s4 + $0x8] sm:$0xff]
        %v1396 = vld [vmem:[%s4 + $0x10] sm:$0xff]
        %v1397 = vld [vmem:[%s4 + $0x18] sm:$0xff]
        %v1398 = vld [vmem:[%s4 + $0x20] sm:$0xff]
        %v1399 = vld [vmem:[%s4 + $0x28] sm:$0xff]
        %v1400 = vld [vmem:[%s4 + $0x30] sm:$0xff]
        %v1401 = vld [vmem:[%s4 + $0x38] sm:$0xff]
        %v1403 = vsel %vm743, %v732, 0
        %1405 = vmatprep.subr.mxu0 0.0
        %1406 = vmatpush1.msra.mxu0 0.0
        %1407 = vmatprep.subr.mxu0 0.0
        %1408 = vmatpush1.msra.mxu0 0.0
        %1409 = vmatprep.subr.mxu0 0.0
        %1410 = vmatpush1.msra.mxu0 0.0
        %1411 = vmatprep.subr.mxu0 0.0
        %1412 = vmatpush1.msra.mxu0 0.0
        %1413 = vmatprep.subr.mxu0 0.0
        %1414 = vmatpush1.msra.mxu0 0.0
        %1415 = vmatprep.subr.mxu0 0.0
        %1416 = vmatpush1.msra.mxu0 0.0
        %1417 = vmatprep.subr.mxu0 0.0
        %1418 = vmatpush1.msra.mxu0 0.0
        %1419 = vmatprep.subr.mxu0 0.0
        %1420 = vmatpush1.msra.mxu0 0.0
        %1421 = vmatprep.subr.mxu0 0.0
        %1422 = vmatpush1.msra.mxu0 %v1401
        %1423 = vmatprep.subr.mxu0 0.0
        %1424 = vmatpush1.msra.mxu0 %v1400
        %1425 = vmatprep.subr.mxu0 0.0
        %1426 = vmatpush1.msra.mxu0 %v1399
        %1427 = vmatprep.subr.mxu0 0.0
        %1428 = vmatpush1.msra.mxu0 %v1398
        %1429 = vmatprep.subr.mxu0 0.0
        %1430 = vmatpush1.msra.mxu0 %v1397
        %1431 = vmatprep.subr.mxu0 0.0
        %1432 = vmatpush1.msra.mxu0 %v1396
        %1433 = vmatprep.subr.mxu0 0.0
        %1434 = vmatpush1.msra.mxu0 %v1395
        %1435 = vmatprep.subr.mxu0 0.0
        %1436 = vmatpush1.msra.mxu0 %v1394
        %1437 = vmatprep.subr.mxu0 0.0
        %1438 = vmatpush2.msra.mxu0 0.0
        %1439 = vmatprep.subr.mxu0 0.0
        %1440 = vmatpush2.msra.mxu0 0.0
        %1441 = vmatprep.subr.mxu0 0.0
        %1442 = vmatpush2.msra.mxu0 0.0
        %1443 = vmatprep.subr.mxu0 0.0
        %1444 = vmatpush2.msra.mxu0 0.0
        %1445 = vmatprep.subr.mxu0 0.0
        %1446 = vmatpush2.msra.mxu0 0.0
        %1447 = vmatprep.subr.mxu0 0.0
        %1448 = vmatpush2.msra.mxu0 0.0
        %1449 = vmatprep.subr.mxu0 0.0
        %1450 = vmatpush2.msra.mxu0 0.0
        %1451 = vmatprep.subr.mxu0 0.0
        %1452 = vmatpush2.msra.mxu0 0.0
        %1453 = vmatprep.subr.mxu0 0.0
        %1454 = vmatpush2.msra.mxu0 0.0
        %1455 = vmatprep.subr.mxu0 0.0
        %1456 = vmatpush2.msra.mxu0 0.0
        %1457 = vmatprep.subr.mxu0 0.0
        %1458 = vmatpush2.msra.mxu0 0.0
        %1459 = vmatprep.subr.mxu0 0.0
        %1460 = vmatpush2.msra.mxu0 0.0
        %1461 = vmatprep.subr.mxu0 0.0
        %1462 = vmatpush2.msra.mxu0 0.0
        %1463 = vmatprep.subr.mxu0 0.0
        %1464 = vmatpush2.msra.mxu0 0.0
        %1465 = vmatprep.subr.mxu0 0.0
        %1466 = vmatpush2.msra.mxu0 0.0
        %1467 = vmatprep.subr.mxu0 0.0
        %1468 = vmatpush2.msra.mxu0 0.0
        %1469 = vmatprep.mubr.f32.mxu0 0.0
        %1470 = vmatmul.mubr.f32.gmra.mxu0 %v1403
        %v1471 = vpop.f32.mrf.mxu0
        %v1472 = vadd.f32 0.0, %v1471
        %v1473 = vpop.f32.mrf.mxu0
        %1474 = vdwg.mxu0
        %vm1475 = vcmp.ge.f32.partialorder %v1472, 0.0
        %v1476 = vmul.f32 %v1472, 0.1
        %v1477 = vsel %vm1475, %v1472, %v1476
        %v1478 = vld [vmem:[%s5] sm:$0xff]
        %v1479 = vld [vmem:[%s5 + $0x8] sm:$0xff]
        %v1482 = vcombine.high %v1478, %v1478
        %v1483 = vcombine.high %v1479, %v1479
        %v1485 = vsel %vm824, %v1477, 0
        %v1487 = vsel %vm828, %v1478, 0
        %v1489 = vsel %vm828, %v1482, 0
        %v1491 = vsel %vm828, %v1479, 0
        %v1493 = vsel %vm828, %v1483, 0
        %1495 = vmatprep.subr.mxu0 0.0
        %1496 = vmatpush1.msra.mxu0 0.0
        %1497 = vmatprep.subr.mxu0 0.0
        %1498 = vmatpush1.msra.mxu0 0.0
        %1499 = vmatprep.subr.mxu0 0.0
        %1500 = vmatpush1.msra.mxu0 0.0
        %1501 = vmatprep.subr.mxu0 0.0
        %1502 = vmatpush1.msra.mxu0 0.0
        %1503 = vmatprep.subr.mxu0 0.0
        %1504 = vmatpush1.msra.mxu0 0.0
        %1505 = vmatprep.subr.mxu0 0.0
        %1506 = vmatpush1.msra.mxu0 0.0
        %1507 = vmatprep.subr.mxu0 0.0
        %1508 = vmatpush1.msra.mxu0 0.0
        %1509 = vmatprep.subr.mxu0 0.0
        %1510 = vmatpush1.msra.mxu0 0.0
        %1511 = vmatprep.subr.mxu0 0.0
        %1512 = vmatpush1.msra.mxu0 0.0
        %1513 = vmatprep.subr.mxu0 0.0
        %1514 = vmatpush1.msra.mxu0 0.0
        %1515 = vmatprep.subr.mxu0 0.0
        %1516 = vmatpush1.msra.mxu0 0.0
        %1517 = vmatprep.subr.mxu0 0.0
        %1518 = vmatpush1.msra.mxu0 0.0
        %1519 = vmatprep.subr.mxu0 0.0
        %1520 = vmatpush1.msra.mxu0 0.0
        %1521 = vmatprep.subr.mxu0 0.0
        %1522 = vmatpush1.msra.mxu0 0.0
        %1523 = vmatprep.subr.mxu0 0.0
        %1524 = vmatpush1.msra.mxu0 0.0
        %1525 = vmatprep.subr.mxu0 %v1489
        %1526 = vmatpush1.msra.mxu0 %v1487
        %1527 = vmatprep.subr.mxu0 0.0
        %1528 = vmatpush2.msra.mxu0 0.0
        %1529 = vmatprep.subr.mxu0 0.0
        %1530 = vmatpush2.msra.mxu0 0.0
        %1531 = vmatprep.subr.mxu0 0.0
        %1532 = vmatpush2.msra.mxu0 0.0
        %1533 = vmatprep.subr.mxu0 0.0
        %1534 = vmatpush2.msra.mxu0 0.0
        %1535 = vmatprep.subr.mxu0 0.0
        %1536 = vmatpush2.msra.mxu0 0.0
        %1537 = vmatprep.subr.mxu0 0.0
        %1538 = vmatpush2.msra.mxu0 0.0
        %1539 = vmatprep.subr.mxu0 0.0
        %1540 = vmatpush2.msra.mxu0 0.0
        %1541 = vmatprep.subr.mxu0 0.0
        %1542 = vmatpush2.msra.mxu0 0.0
        %1543 = vmatprep.subr.mxu0 0.0
        %1544 = vmatpush2.msra.mxu0 0.0
        %1545 = vmatprep.subr.mxu0 0.0
        %1546 = vmatpush2.msra.mxu0 0.0
        %1547 = vmatprep.subr.mxu0 0.0
        %1548 = vmatpush2.msra.mxu0 0.0
        %1549 = vmatprep.subr.mxu0 0.0
        %1550 = vmatpush2.msra.mxu0 0.0
        %1551 = vmatprep.subr.mxu0 0.0
        %1552 = vmatpush2.msra.mxu0 0.0
        %1553 = vmatprep.subr.mxu0 0.0
        %1554 = vmatpush2.msra.mxu0 0.0
        %1555 = vmatprep.subr.mxu0 0.0
        %1556 = vmatpush2.msra.mxu0 0.0
        %1557 = vmatprep.subr.mxu0 0.0
        %1558 = vmatpush2.msra.mxu0 0.0
        %1559 = vmatprep.mubr.f32.mxu0 0.0
        %1560 = vmatmul.mubr.f32.gmra.mxu0 %v1485
        %v1561 = vpop.f32.mrf.mxu0
        %v1562 = vadd.f32 0.0, %v1561
        %v1563 = vpop.f32.mrf.mxu0
        %v1564 = vadd.f32 0.0, %v1563
        %1565 = vdwg.mxu0
        %1566 = vmatprep.subr.mxu0 0.0
        %1567 = vmatpush1.msra.mxu0 0.0
        %1568 = vmatprep.subr.mxu0 0.0
        %1569 = vmatpush1.msra.mxu0 0.0
        %1570 = vmatprep.subr.mxu0 0.0
        %1571 = vmatpush1.msra.mxu0 0.0
        %1572 = vmatprep.subr.mxu0 0.0
        %1573 = vmatpush1.msra.mxu0 0.0
        %1574 = vmatprep.subr.mxu0 0.0
        %1575 = vmatpush1.msra.mxu0 0.0
        %1576 = vmatprep.subr.mxu0 0.0
        %1577 = vmatpush1.msra.mxu0 0.0
        %1578 = vmatprep.subr.mxu0 0.0
        %1579 = vmatpush1.msra.mxu0 0.0
        %1580 = vmatprep.subr.mxu0 0.0
        %1581 = vmatpush1.msra.mxu0 0.0
        %1582 = vmatprep.subr.mxu0 0.0
        %1583 = vmatpush1.msra.mxu0 0.0
        %1584 = vmatprep.subr.mxu0 0.0
        %1585 = vmatpush1.msra.mxu0 0.0
        %1586 = vmatprep.subr.mxu0 0.0
        %1587 = vmatpush1.msra.mxu0 0.0
        %1588 = vmatprep.subr.mxu0 0.0
        %1589 = vmatpush1.msra.mxu0 0.0
        %1590 = vmatprep.subr.mxu0 0.0
        %1591 = vmatpush1.msra.mxu0 0.0
        %1592 = vmatprep.subr.mxu0 0.0
        %1593 = vmatpush1.msra.mxu0 0.0
        %1594 = vmatprep.subr.mxu0 0.0
        %1595 = vmatpush1.msra.mxu0 0.0
        %1596 = vmatprep.subr.mxu0 %v1493
        %1597 = vmatpush1.msra.mxu0 %v1491
        %1598 = vmatprep.subr.mxu0 0.0
        %1599 = vmatpush2.msra.mxu0 0.0
        %1600 = vmatprep.subr.mxu0 0.0
        %1601 = vmatpush2.msra.mxu0 0.0
        %1602 = vmatprep.subr.mxu0 0.0
        %1603 = vmatpush2.msra.mxu0 0.0
        %1604 = vmatprep.subr.mxu0 0.0
        %1605 = vmatpush2.msra.mxu0 0.0
        %1606 = vmatprep.subr.mxu0 0.0
        %1607 = vmatpush2.msra.mxu0 0.0
        %1608 = vmatprep.subr.mxu0 0.0
        %1609 = vmatpush2.msra.mxu0 0.0
        %1610 = vmatprep.subr.mxu0 0.0
        %1611 = vmatpush2.msra.mxu0 0.0
        %1612 = vmatprep.subr.mxu0 0.0
        %1613 = vmatpush2.msra.mxu0 0.0
        %1614 = vmatprep.subr.mxu0 0.0
        %1615 = vmatpush2.msra.mxu0 0.0
        %1616 = vmatprep.subr.mxu0 0.0
        %1617 = vmatpush2.msra.mxu0 0.0
        %1618 = vmatprep.subr.mxu0 0.0
        %1619 = vmatpush2.msra.mxu0 0.0
        %1620 = vmatprep.subr.mxu0 0.0
        %1621 = vmatpush2.msra.mxu0 0.0
        %1622 = vmatprep.subr.mxu0 0.0
        %1623 = vmatpush2.msra.mxu0 0.0
        %1624 = vmatprep.subr.mxu0 0.0
        %1625 = vmatpush2.msra.mxu0 0.0
        %1626 = vmatprep.subr.mxu0 0.0
        %1627 = vmatpush2.msra.mxu0 0.0
        %1628 = vmatprep.subr.mxu0 0.0
        %1629 = vmatpush2.msra.mxu0 0.0
        %1630 = vmatprep.mubr.f32.mxu0 0.0
        %1631 = vmatmul.mubr.f32.gmra.mxu0 %v1485
        %v1632 = vpop.f32.mrf.mxu0
        %v1633 = vadd.f32 0.0, %v1632
        %v1634 = vpop.f32.mrf.mxu0
        %v1635 = vadd.f32 0.0, %v1634
        %1636 = vdwg.mxu0
        %v1637 = vxor.u32 %v1562, 2147483648
        %v1638 = vxor.u32 %v1564, 2147483648
        %v1639 = vxor.u32 %v1633, 2147483648
        %v1640 = vxor.u32 %v1635, 2147483648
        %v1641 = vmul.f32 %v1637, 1.442695
        %v1642 = vpow.pop %v1641
        %v1643 = vmul.f32 %v1638, 1.442695
        %v1644 = vpow.pop %v1643
        %v1645 = vmul.f32 %v1639, 1.442695
        %v1646 = vpow.pop %v1645
        %v1647 = vmul.f32 %v1640, 1.442695
        %v1648 = vpow.pop %v1647
        %v1649 = vadd.f32 %v1642, 1.0
        %v1650 = vadd.f32 %v1644, 1.0
        %v1651 = vadd.f32 %v1646, 1.0
        %v1652 = vadd.f32 %v1648, 1.0
        %v1653 = vrcp.pop %v1649
        %v1654 = vmul.f32 1.0, %v1653
        %v1655 = vrcp.pop %v1650
        %v1656 = vmul.f32 1.0, %v1655
        %v1657 = vrcp.pop %v1651
        %v1658 = vmul.f32 1.0, %v1657
        %v1659 = vrcp.pop %v1652
        %v1660 = vmul.f32 1.0, %v1659
        %v1661 = vld [vmem:[%s8] sm:$0xff]
        %v1662 = vld [vmem:[%s8 + $0x8] sm:$0xff]
        %v1663 = vld [vmem:[%s8 + $0x10] sm:$0xff]
        %v1664 = vld [vmem:[%s8 + $0x18] sm:$0xff]
        %v1665 = vld [vmem:[%s8 + $0x20] sm:$0xff]
        %v1666 = vld [vmem:[%s8 + $0x28] sm:$0xff]
        %v1667 = vld [vmem:[%s8 + $0x30] sm:$0xff]
        %v1668 = vld [vmem:[%s8 + $0x38] sm:$0xff]
        %v1669 = vld [vmem:[%s8 + $0x40] sm:$0xff]
        %v1670 = vld [vmem:[%s8 + $0x48] sm:$0xff]
        %v1671 = vld [vmem:[%s8 + $0x50] sm:$0xff]
        %v1672 = vld [vmem:[%s8 + $0x58] sm:$0xff]
        %v1673 = vld [vmem:[%s8 + $0x60] sm:$0xff]
        %v1674 = vld [vmem:[%s8 + $0x68] sm:$0xff]
        %v1675 = vld [vmem:[%s8 + $0x70] sm:$0xff]
        %v1676 = vld [vmem:[%s8 + $0x78] sm:$0xff]
        %v1677 = vld [vmem:[%s8 + $0x80] sm:$0xff]
        %v1678 = vld [vmem:[%s8 + $0x88] sm:$0xff]
        %v1679 = vld [vmem:[%s8 + $0x90] sm:$0xff]
        %v1680 = vld [vmem:[%s8 + $0x98] sm:$0xff]
        %v1681 = vld [vmem:[%s8 + $0xa0] sm:$0xff]
        %v1682 = vld [vmem:[%s8 + $0xa8] sm:$0xff]
        %v1683 = vld [vmem:[%s8 + $0xb0] sm:$0xff]
        %v1684 = vld [vmem:[%s8 + $0xb8] sm:$0xff]
        %v1685 = vld [vmem:[%s8 + $0xc0] sm:$0xff]
        %v1686 = vld [vmem:[%s8 + $0xc8] sm:$0xff]
        %v1687 = vld [vmem:[%s8 + $0xd0] sm:$0xff]
        %v1688 = vld [vmem:[%s8 + $0xd8] sm:$0xff]
        %v1689 = vld [vmem:[%s8 + $0xe0] sm:$0xff]
        %v1690 = vld [vmem:[%s8 + $0xe8] sm:$0xff]
        %v1691 = vld [vmem:[%s8 + $0xf0] sm:$0xff]
        %v1692 = vld [vmem:[%s8 + $0xf8] sm:$0xff]
        %v1693 = vld [vmem:[%s8 + $0x100] sm:$0xff]
        %v1694 = vld [vmem:[%s8 + $0x108] sm:$0xff]
        %v1695 = vld [vmem:[%s8 + $0x110] sm:$0xff]
        %v1696 = vld [vmem:[%s8 + $0x118] sm:$0xff]
        %v1697 = vld [vmem:[%s8 + $0x120] sm:$0xff]
        %v1698 = vld [vmem:[%s8 + $0x128] sm:$0xff]
        %v1699 = vld [vmem:[%s8 + $0x130] sm:$0xff]
        %v1700 = vld [vmem:[%s8 + $0x138] sm:$0xff]
        %v1701 = vld [vmem:[%s8 + $0x140] sm:$0xff]
        %v1702 = vld [vmem:[%s8 + $0x148] sm:$0xff]
        %v1703 = vld [vmem:[%s8 + $0x150] sm:$0xff]
        %v1704 = vld [vmem:[%s8 + $0x158] sm:$0xff]
        %v1705 = vld [vmem:[%s8 + $0x160] sm:$0xff]
        %v1706 = vld [vmem:[%s8 + $0x168] sm:$0xff]
        %v1707 = vld [vmem:[%s8 + $0x170] sm:$0xff]
        %v1708 = vld [vmem:[%s8 + $0x178] sm:$0xff]
        %v1709 = vld [vmem:[%s8 + $0x180] sm:$0xff]
        %v1710 = vld [vmem:[%s8 + $0x188] sm:$0xff]
        %v1711 = vld [vmem:[%s8 + $0x190] sm:$0xff]
        %v1712 = vld [vmem:[%s8 + $0x198] sm:$0xff]
        %v1713 = vld [vmem:[%s8 + $0x1a0] sm:$0xff]
        %v1714 = vld [vmem:[%s8 + $0x1a8] sm:$0xff]
        %v1715 = vld [vmem:[%s8 + $0x1b0] sm:$0xff]
        %v1716 = vld [vmem:[%s8 + $0x1b8] sm:$0xff]
        %v1717 = vld [vmem:[%s8 + $0x1c0] sm:$0xff]
        %v1718 = vld [vmem:[%s8 + $0x1c8] sm:$0xff]
        %v1719 = vld [vmem:[%s8 + $0x1d0] sm:$0xff]
        %v1720 = vld [vmem:[%s8 + $0x1d8] sm:$0xff]
        %v1721 = vld [vmem:[%s8 + $0x1e0] sm:$0xff]
        %v1722 = vld [vmem:[%s8 + $0x1e8] sm:$0xff]
        %v1723 = vld [vmem:[%s8 + $0x1f0] sm:$0xff]
        %v1724 = vld [vmem:[%s8 + $0x1f8] sm:$0xff]
        %1725 = vmatprep.subr.mxu0 0.0
        %1726 = vmatpush1.msra.mxu0 %v1676
        %1727 = vmatprep.subr.mxu0 0.0
        %1728 = vmatpush1.msra.mxu0 %v1675
        %1729 = vmatprep.subr.mxu0 0.0
        %1730 = vmatpush1.msra.mxu0 %v1674
        %1731 = vmatprep.subr.mxu0 0.0
        %1732 = vmatpush1.msra.mxu0 %v1673
        %1733 = vmatprep.subr.mxu0 0.0
        %1734 = vmatpush1.msra.mxu0 %v1672
        %1735 = vmatprep.subr.mxu0 0.0
        %1736 = vmatpush1.msra.mxu0 %v1671
        %1737 = vmatprep.subr.mxu0 0.0
        %1738 = vmatpush1.msra.mxu0 %v1670
        %1739 = vmatprep.subr.mxu0 0.0
        %1740 = vmatpush1.msra.mxu0 %v1669
        %1741 = vmatprep.subr.mxu0 0.0
        %1742 = vmatpush1.msra.mxu0 %v1668
        %1743 = vmatprep.subr.mxu0 0.0
        %1744 = vmatpush1.msra.mxu0 %v1667
        %1745 = vmatprep.subr.mxu0 0.0
        %1746 = vmatpush1.msra.mxu0 %v1666
        %1747 = vmatprep.subr.mxu0 0.0
        %1748 = vmatpush1.msra.mxu0 %v1665
        %1749 = vmatprep.subr.mxu0 0.0
        %1750 = vmatpush1.msra.mxu0 %v1664
        %1751 = vmatprep.subr.mxu0 0.0
        %1752 = vmatpush1.msra.mxu0 %v1663
        %1753 = vmatprep.subr.mxu0 0.0
        %1754 = vmatpush1.msra.mxu0 %v1662
        %1755 = vmatprep.subr.mxu0 0.0
        %1756 = vmatpush1.msra.mxu0 %v1661
        %1757 = vmatprep.subr.mxu0 0.0
        %1758 = vmatpush2.msra.mxu0 %v1692
        %1759 = vmatprep.subr.mxu0 0.0
        %1760 = vmatpush2.msra.mxu0 %v1691
        %1761 = vmatprep.subr.mxu0 0.0
        %1762 = vmatpush2.msra.mxu0 %v1690
        %1763 = vmatprep.subr.mxu0 0.0
        %1764 = vmatpush2.msra.mxu0 %v1689
        %1765 = vmatprep.subr.mxu0 0.0
        %1766 = vmatpush2.msra.mxu0 %v1688
        %1767 = vmatprep.subr.mxu0 0.0
        %1768 = vmatpush2.msra.mxu0 %v1687
        %1769 = vmatprep.subr.mxu0 0.0
        %1770 = vmatpush2.msra.mxu0 %v1686
        %1771 = vmatprep.subr.mxu0 0.0
        %1772 = vmatpush2.msra.mxu0 %v1685
        %1773 = vmatprep.subr.mxu0 0.0
        %1774 = vmatpush2.msra.mxu0 %v1684
        %1775 = vmatprep.subr.mxu0 0.0
        %1776 = vmatpush2.msra.mxu0 %v1683
        %1777 = vmatprep.subr.mxu0 0.0
        %1778 = vmatpush2.msra.mxu0 %v1682
        %1779 = vmatprep.subr.mxu0 0.0
        %1780 = vmatpush2.msra.mxu0 %v1681
        %1781 = vmatprep.subr.mxu0 0.0
        %1782 = vmatpush2.msra.mxu0 %v1680
        %1783 = vmatprep.subr.mxu0 0.0
        %1784 = vmatpush2.msra.mxu0 %v1679
        %1785 = vmatprep.subr.mxu0 0.0
        %1786 = vmatpush2.msra.mxu0 %v1678
        %1787 = vmatprep.subr.mxu0 0.0
        %1788 = vmatpush2.msra.mxu0 %v1677
        %1789 = vmatprep.mubr.f32.mxu0 %v359
        %1790 = vmatmul.mubr.f32.gmra.mxu0 %v358
        %v1791 = vpop.f32.mrf.mxu0
        %v1792 = vadd.f32 0.0, %v1791
        %v1793 = vpop.f32.mrf.mxu0
        %1794 = vdwg.mxu0
        %1795 = vmatprep.subr.mxu0 0.0
        %1796 = vmatpush1.msra.mxu0 %v1708
        %1797 = vmatprep.subr.mxu0 0.0
        %1798 = vmatpush1.msra.mxu0 %v1707
        %1799 = vmatprep.subr.mxu0 0.0
        %1800 = vmatpush1.msra.mxu0 %v1706
        %1801 = vmatprep.subr.mxu0 0.0
        %1802 = vmatpush1.msra.mxu0 %v1705
        %1803 = vmatprep.subr.mxu0 0.0
        %1804 = vmatpush1.msra.mxu0 %v1704
        %1805 = vmatprep.subr.mxu0 0.0
        %1806 = vmatpush1.msra.mxu0 %v1703
        %1807 = vmatprep.subr.mxu0 0.0
        %1808 = vmatpush1.msra.mxu0 %v1702
        %1809 = vmatprep.subr.mxu0 0.0
        %1810 = vmatpush1.msra.mxu0 %v1701
        %1811 = vmatprep.subr.mxu0 0.0
        %1812 = vmatpush1.msra.mxu0 %v1700
        %1813 = vmatprep.subr.mxu0 0.0
        %1814 = vmatpush1.msra.mxu0 %v1699
        %1815 = vmatprep.subr.mxu0 0.0
        %1816 = vmatpush1.msra.mxu0 %v1698
        %1817 = vmatprep.subr.mxu0 0.0
        %1818 = vmatpush1.msra.mxu0 %v1697
        %1819 = vmatprep.subr.mxu0 0.0
        %1820 = vmatpush1.msra.mxu0 %v1696
        %1821 = vmatprep.subr.mxu0 0.0
        %1822 = vmatpush1.msra.mxu0 %v1695
        %1823 = vmatprep.subr.mxu0 0.0
        %1824 = vmatpush1.msra.mxu0 %v1694
        %1825 = vmatprep.subr.mxu0 0.0
        %1826 = vmatpush1.msra.mxu0 %v1693
        %1827 = vmatprep.subr.mxu0 0.0
        %1828 = vmatpush2.msra.mxu0 %v1724
        %1829 = vmatprep.subr.mxu0 0.0
        %1830 = vmatpush2.msra.mxu0 %v1723
        %1831 = vmatprep.subr.mxu0 0.0
        %1832 = vmatpush2.msra.mxu0 %v1722
        %1833 = vmatprep.subr.mxu0 0.0
        %1834 = vmatpush2.msra.mxu0 %v1721
        %1835 = vmatprep.subr.mxu0 0.0
        %1836 = vmatpush2.msra.mxu0 %v1720
        %1837 = vmatprep.subr.mxu0 0.0
        %1838 = vmatpush2.msra.mxu0 %v1719
        %1839 = vmatprep.subr.mxu0 0.0
        %1840 = vmatpush2.msra.mxu0 %v1718
        %1841 = vmatprep.subr.mxu0 0.0
        %1842 = vmatpush2.msra.mxu0 %v1717
        %1843 = vmatprep.subr.mxu0 0.0
        %1844 = vmatpush2.msra.mxu0 %v1716
        %1845 = vmatprep.subr.mxu0 0.0
        %1846 = vmatpush2.msra.mxu0 %v1715
        %1847 = vmatprep.subr.mxu0 0.0
        %1848 = vmatpush2.msra.mxu0 %v1714
        %1849 = vmatprep.subr.mxu0 0.0
        %1850 = vmatpush2.msra.mxu0 %v1713
        %1851 = vmatprep.subr.mxu0 0.0
        %1852 = vmatpush2.msra.mxu0 %v1712
        %1853 = vmatprep.subr.mxu0 0.0
        %1854 = vmatpush2.msra.mxu0 %v1711
        %1855 = vmatprep.subr.mxu0 0.0
        %1856 = vmatpush2.msra.mxu0 %v1710
        %1857 = vmatprep.subr.mxu0 0.0
        %1858 = vmatpush2.msra.mxu0 %v1709
        %1859 = vmatprep.mubr.f32.mxu0 %v361
        %1860 = vmatmul.mubr.f32.gmra.mxu0 %v360
        %v1861 = vpop.f32.mrf.mxu0
        %v1862 = vadd.f32 %v1792, %v1861
        %v1863 = vpop.f32.mrf.mxu0
        %1864 = vdwg.mxu0
        %vm1865 = vcmp.ge.f32.partialorder %v1862, 0.0
        %v1866 = vmul.f32 %v1862, 0.1
        %v1867 = vsel %vm1865, %v1862, %v1866
        %v1868 = vld [vmem:[%s9] sm:$0xff]
        %v1869 = vld [vmem:[%s9 + $0x8] sm:$0xff]
        %v1870 = vld [vmem:[%s9 + $0x10] sm:$0xff]
        %v1871 = vld [vmem:[%s9 + $0x18] sm:$0xff]
        %v1872 = vld [vmem:[%s9 + $0x20] sm:$0xff]
        %v1873 = vld [vmem:[%s9 + $0x28] sm:$0xff]
        %v1874 = vld [vmem:[%s9 + $0x30] sm:$0xff]
        %v1875 = vld [vmem:[%s9 + $0x38] sm:$0xff]
        %v1876 = vld [vmem:[%s9 + $0x40] sm:$0xff]
        %v1877 = vld [vmem:[%s9 + $0x48] sm:$0xff]
        %v1878 = vld [vmem:[%s9 + $0x50] sm:$0xff]
        %v1879 = vld [vmem:[%s9 + $0x58] sm:$0xff]
        %v1880 = vld [vmem:[%s9 + $0x60] sm:$0xff]
        %v1881 = vld [vmem:[%s9 + $0x68] sm:$0xff]
        %v1882 = vld [vmem:[%s9 + $0x70] sm:$0xff]
        %v1883 = vld [vmem:[%s9 + $0x78] sm:$0xff]
        %v1885 = vsel %vm1224, %v1867, 0
        %1887 = vmatprep.subr.mxu0 0.0
        %1888 = vmatpush1.msra.mxu0 0.0
        %1889 = vmatprep.subr.mxu0 0.0
        %1890 = vmatpush1.msra.mxu0 0.0
        %1891 = vmatprep.subr.mxu0 0.0
        %1892 = vmatpush1.msra.mxu0 0.0
        %1893 = vmatprep.subr.mxu0 0.0
        %1894 = vmatpush1.msra.mxu0 0.0
        %1895 = vmatprep.subr.mxu0 0.0
        %1896 = vmatpush1.msra.mxu0 0.0
        %1897 = vmatprep.subr.mxu0 0.0
        %1898 = vmatpush1.msra.mxu0 0.0
        %1899 = vmatprep.subr.mxu0 0.0
        %1900 = vmatpush1.msra.mxu0 0.0
        %1901 = vmatprep.subr.mxu0 0.0
        %1902 = vmatpush1.msra.mxu0 0.0
        %1903 = vmatprep.subr.mxu0 0.0
        %1904 = vmatpush1.msra.mxu0 0.0
        %1905 = vmatprep.subr.mxu0 0.0
        %1906 = vmatpush1.msra.mxu0 0.0
        %1907 = vmatprep.subr.mxu0 0.0
        %1908 = vmatpush1.msra.mxu0 0.0
        %1909 = vmatprep.subr.mxu0 0.0
        %1910 = vmatpush1.msra.mxu0 0.0
        %1911 = vmatprep.subr.mxu0 %v1881
        %1912 = vmatpush1.msra.mxu0 %v1880
        %1913 = vmatprep.subr.mxu0 %v1877
        %1914 = vmatpush1.msra.mxu0 %v1876
        %1915 = vmatprep.subr.mxu0 %v1873
        %1916 = vmatpush1.msra.mxu0 %v1872
        %1917 = vmatprep.subr.mxu0 %v1869
        %1918 = vmatpush1.msra.mxu0 %v1868
        %1919 = vmatprep.subr.mxu0 0.0
        %1920 = vmatpush2.msra.mxu0 0.0
        %1921 = vmatprep.subr.mxu0 0.0
        %1922 = vmatpush2.msra.mxu0 0.0
        %1923 = vmatprep.subr.mxu0 0.0
        %1924 = vmatpush2.msra.mxu0 0.0
        %1925 = vmatprep.subr.mxu0 0.0
        %1926 = vmatpush2.msra.mxu0 0.0
        %1927 = vmatprep.subr.mxu0 0.0
        %1928 = vmatpush2.msra.mxu0 0.0
        %1929 = vmatprep.subr.mxu0 0.0
        %1930 = vmatpush2.msra.mxu0 0.0
        %1931 = vmatprep.subr.mxu0 0.0
        %1932 = vmatpush2.msra.mxu0 0.0
        %1933 = vmatprep.subr.mxu0 0.0
        %1934 = vmatpush2.msra.mxu0 0.0
        %1935 = vmatprep.subr.mxu0 0.0
        %1936 = vmatpush2.msra.mxu0 0.0
        %1937 = vmatprep.subr.mxu0 0.0
        %1938 = vmatpush2.msra.mxu0 0.0
        %1939 = vmatprep.subr.mxu0 0.0
        %1940 = vmatpush2.msra.mxu0 0.0
        %1941 = vmatprep.subr.mxu0 0.0
        %1942 = vmatpush2.msra.mxu0 0.0
        %1943 = vmatprep.subr.mxu0 0.0
        %1944 = vmatpush2.msra.mxu0 0.0
        %1945 = vmatprep.subr.mxu0 0.0
        %1946 = vmatpush2.msra.mxu0 0.0
        %1947 = vmatprep.subr.mxu0 0.0
        %1948 = vmatpush2.msra.mxu0 0.0
        %1949 = vmatprep.subr.mxu0 0.0
        %1950 = vmatpush2.msra.mxu0 0.0
        %1951 = vmatprep.mubr.f32.mxu0 0.0
        %1952 = vmatmul.mubr.f32.gmra.mxu0 %v1885
        %v1953 = vpop.f32.mrf.mxu0
        %v1954 = vadd.f32 0.0, %v1953
        %v1955 = vpop.f32.mrf.mxu0
        %v1956 = vadd.f32 0.0, %v1955
        %1957 = vdwg.mxu0
        %1958 = vmatprep.subr.mxu0 0.0
        %1959 = vmatpush1.msra.mxu0 0.0
        %1960 = vmatprep.subr.mxu0 0.0
        %1961 = vmatpush1.msra.mxu0 0.0
        %1962 = vmatprep.subr.mxu0 0.0
        %1963 = vmatpush1.msra.mxu0 0.0
        %1964 = vmatprep.subr.mxu0 0.0
        %1965 = vmatpush1.msra.mxu0 0.0
        %1966 = vmatprep.subr.mxu0 0.0
        %1967 = vmatpush1.msra.mxu0 0.0
        %1968 = vmatprep.subr.mxu0 0.0
        %1969 = vmatpush1.msra.mxu0 0.0
        %1970 = vmatprep.subr.mxu0 0.0
        %1971 = vmatpush1.msra.mxu0 0.0
        %1972 = vmatprep.subr.mxu0 0.0
        %1973 = vmatpush1.msra.mxu0 0.0
        %1974 = vmatprep.subr.mxu0 0.0
        %1975 = vmatpush1.msra.mxu0 0.0
        %1976 = vmatprep.subr.mxu0 0.0
        %1977 = vmatpush1.msra.mxu0 0.0
        %1978 = vmatprep.subr.mxu0 0.0
        %1979 = vmatpush1.msra.mxu0 0.0
        %1980 = vmatprep.subr.mxu0 0.0
        %1981 = vmatpush1.msra.mxu0 0.0
        %1982 = vmatprep.subr.mxu0 %v1883
        %1983 = vmatpush1.msra.mxu0 %v1882
        %1984 = vmatprep.subr.mxu0 %v1879
        %1985 = vmatpush1.msra.mxu0 %v1878
        %1986 = vmatprep.subr.mxu0 %v1875
        %1987 = vmatpush1.msra.mxu0 %v1874
        %1988 = vmatprep.subr.mxu0 %v1871
        %1989 = vmatpush1.msra.mxu0 %v1870
        %1990 = vmatprep.subr.mxu0 0.0
        %1991 = vmatpush2.msra.mxu0 0.0
        %1992 = vmatprep.subr.mxu0 0.0
        %1993 = vmatpush2.msra.mxu0 0.0
        %1994 = vmatprep.subr.mxu0 0.0
        %1995 = vmatpush2.msra.mxu0 0.0
        %1996 = vmatprep.subr.mxu0 0.0
        %1997 = vmatpush2.msra.mxu0 0.0
        %1998 = vmatprep.subr.mxu0 0.0
        %1999 = vmatpush2.msra.mxu0 0.0
        %2000 = vmatprep.subr.mxu0 0.0
        %2001 = vmatpush2.msra.mxu0 0.0
        %2002 = vmatprep.subr.mxu0 0.0
        %2003 = vmatpush2.msra.mxu0 0.0
        %2004 = vmatprep.subr.mxu0 0.0
        %2005 = vmatpush2.msra.mxu0 0.0
        %2006 = vmatprep.subr.mxu0 0.0
        %2007 = vmatpush2.msra.mxu0 0.0
        %2008 = vmatprep.subr.mxu0 0.0
        %2009 = vmatpush2.msra.mxu0 0.0
        %2010 = vmatprep.subr.mxu0 0.0
        %2011 = vmatpush2.msra.mxu0 0.0
        %2012 = vmatprep.subr.mxu0 0.0
        %2013 = vmatpush2.msra.mxu0 0.0
        %2014 = vmatprep.subr.mxu0 0.0
        %2015 = vmatpush2.msra.mxu0 0.0
        %2016 = vmatprep.subr.mxu0 0.0
        %2017 = vmatpush2.msra.mxu0 0.0
        %2018 = vmatprep.subr.mxu0 0.0
        %2019 = vmatpush2.msra.mxu0 0.0
        %2020 = vmatprep.subr.mxu0 0.0
        %2021 = vmatpush2.msra.mxu0 0.0
        %2022 = vmatprep.mubr.f32.mxu0 0.0
        %2023 = vmatmul.mubr.f32.gmra.mxu0 %v1885
        %v2024 = vpop.f32.mrf.mxu0
        %v2025 = vadd.f32 0.0, %v2024
        %v2026 = vpop.f32.mrf.mxu0
        %v2027 = vadd.f32 0.0, %v2026
        %2028 = vdwg.mxu0
        %v2029 = vmul.f32 %v358, %v996
        %v2030 = vmul.f32 %v359, %v998
        %v2031 = vmul.f32 %v360, %v1000
        %v2032 = vmul.f32 %v361, %v1002
        %v2033 = vadd.f32 %v358, %v1954
        %v2034 = vadd.f32 %v359, %v1956
        %v2035 = vadd.f32 %v360, %v2025
        %v2036 = vadd.f32 %v361, %v2027
        %v2037 = vmul.f32 %v2029, %v2033
        %v2038 = vmul.f32 %v2030, %v2034
        %v2039 = vmul.f32 %v2031, %v2035
        %v2040 = vmul.f32 %v2032, %v2036
        %v2041 = vmul.f32 %v1387, %v1654
        %v2042 = vmul.f32 %v1389, %v1656
        %v2043 = vmul.f32 %v1391, %v1658
        %v2044 = vmul.f32 %v1393, %v1660
        %v2045 = vlaneseq
        %v2046 = vshrl.u32 %v2045, 7
        %v2047 = vsub.s32 0, %v2046
        %v2048 = vrot.slane %v2041, %v2047
        %v2049 = vlaneseq
        %v2050 = vshrl.u32 %v2049, 7
        %v2051 = vsub.s32 0, %v2050
        %v2052 = vrot.slane %v2042, %v2051
        %v2053 = vlaneseq
        %v2054 = vshrl.u32 %v2053, 7
        %v2055 = vsub.s32 0, %v2054
        %v2056 = vrot.slane %v2043, %v2055
        %v2057 = vlaneseq
        %v2058 = vshrl.u32 %v2057, 7
        %v2059 = vsub.s32 0, %v2058
        %v2060 = vrot.slane %v2044, %v2059
        %v2061 = vmul.f32 %v2037, %v2048
        %v2062 = vmul.f32 %v2038, %v2052
        %v2063 = vmul.f32 %v2039, %v2056
        %v2064 = vmul.f32 %v2040, %v2060
        %2065 = vst [vmem:[%s352] sm:$0xff] %v2061
        %2066 = vst [vmem:[%s352 + $0x8] sm:$0xff] %v2062
        %2067 = vst [vmem:[%s352 + $0x10] sm:$0xff] %v2063
        %2068 = vst [vmem:[%s352 + $0x18] sm:$0xff] %v2064
        %s2069 = sand.u32 %s247, 1
        %s2070 = scalar_lea.sflag [#allocation3], %s2069
        %s2071 = sand.u32 %s247, 1
        %s2072 = smul.addr %s2071, 32
        %s2073 = scalar_lea.vmem [#allocation2], %s2072
        // Predicated region
        $region61: #{tpu_custom_call.1} parent=59 // pred_check
          %p2074 = pneg %p257
        $region62: #{tpu_custom_call.1} parent=59 // pred_check_branch
          %2076 = sbr.rel (%p2074) target = $region64
        $region63: #{tpu_custom_call.1} parent=59 // pred_region
          %s2078 = ssub.s32 512, 512
          %2079 = vsyncadd %s2070, %s2078
          %s2080 = smul.addr %s24, 4
          %s2081 = smul.addr %s2080, 128
          %s2082 = scalar_lea.hbm %s10, %s2081
          %s2084 = sshll.u32 %s2073, 4
          %s2085 = int_to_ptr.vmem [resolvable:$true] %s2084
          %2087 = dma.vmem_to_hbm [thread:$0]  %s2085, 512, %s2082, %s2070
        $region64: #{tpu_custom_call.1} parent=59 // pred_fallthru
          _
      $region60: #{tpu_custom_call.1} parent=5 // pred_fallthru
        _
      %p2088 = scmp.le.s32.totalorder 2, %s19
      // Predicated region
      $region65: #{tpu_custom_call.1} parent=5 // pred_check
        %p2089 = pneg %p2088
      $region66: #{tpu_custom_call.1} parent=5 // pred_check_branch
        %2091 = sbr.rel (%p2089) target = $region68
      $region67: #{tpu_custom_call.1} parent=5 // pred_region
        %s2092 = ssub.s32 %s19, 2
        // Predicated region
        $region69: #{tpu_custom_call.1} parent=67 // pred_check
          %p2093 = pneg %p263
        $region70: #{tpu_custom_call.1} parent=67 // pred_check_branch
          %2095 = sbr.rel (%p2093) target = $region72
        $region71: #{tpu_custom_call.1} parent=67 // pred_region
          %s2096 = sand.u32 %s248, 1
          %s2097 = scalar_lea.sflag [#allocation3], %s2096
          %s2098 = sand.u32 %s248, 1
          %s2099 = smul.addr %s2098, 32
          %s2100 = scalar_lea.vmem [#allocation2], %s2099
          %2101 = dma.done %s2097, 512
        $region72: #{tpu_custom_call.1} parent=67 // pred_fallthru
          _
      $region68: #{tpu_custom_call.1} parent=5 // pred_fallthru
        _
    $region6: #{tpu_custom_call.1} parent=1 // loop_footer
      %s23 = sadd.s32 1, %s19
    $region7: #{tpu_custom_call.1} parent=1 // loop_footer_branch
      %18 = sbr.rel target = $region3
    $region8: #{tpu_custom_call.1} parent=1 // loop_exit
      _
    %2102 = vsyncpa [#allocation3], 1
    %s2103 = scalar_lea.sflag [#allocation3], 1
    %2104 = vsyncpa %s2103, 1

</llo_original>
